<compile_context>
chip_gen: v7x
topology: tpu7x:2x2x1
jax: 0.10.0
libtpu: 0.0.40
codegen_flags: <defaults>
</compile_context>

<pallas_src>
import functools

import jax
import jax.numpy as jnp
from jax import lax
from jax.experimental import pallas as pl
from jax.experimental.pallas import tpu as pltpu

LN_EPS = 1e-5  # torch.nn.LayerNorm default eps


def _tile(total, target, align):
    """Largest t <= target that divides `total` and is `align`-aligned, else full."""
    if total <= target:
        return total
    for t in range(min(total, target), 0, -1):
        if total % t == 0 and t % align == 0:
            return t
    return total


def _pick_gemm_tile(N, s, batch, budget_bytes):
    """Largest 128-aligned divisor TN of N (capped at 1024) whose K2 VMEM fits."""
    tn = None
    for cand in range(min(N, 1024), 127, -128):
        if N % cand:
            continue
        # bf16: a + b operand blocks (double-buffered) + output block (double-buffered)
        need = (4 * s * cand + 2 * cand * cand) * 2
        if need <= budget_bytes:
            tn = cand
            break
    if tn is None:
        tn = _tile(N, 128, 128)
    # v7x has 2 TensorCores per chip: keep >= 2 parallel output blocks when B == 1.
    if batch == 1 and tn == N and N >= 256:
        tn = _tile(N, N // 2, 128)
    return tn


# --------------------------------------------------------------------------
# Kernel 1: LayerNorm(c_m) + fused (linear_a || linear_b) + msa_mask.
#   block: m (T1, c_m), mask (T1, 1)  ->  a, b (T1, c_h) in bf16
# --------------------------------------------------------------------------
def ln_proj_kernel(m_ref, mask_ref, gamma_ref, beta_ref, w_ref, bias_ref,
                   a_ref, b_ref, *, c_h):
    x = m_ref[0].astype(jnp.float32)                # (T1, c_m)
    mask = mask_ref[0].astype(jnp.float32)          # (T1, 1)

    mu = jnp.mean(x, axis=-1, keepdims=True)
    var = jnp.mean((x - mu) ** 2, axis=-1, keepdims=True)
    xn = (x - mu) * lax.rsqrt(var + LN_EPS)
    xn = xn * gamma_ref[...] + beta_ref[...]

    # single fused projection: (T1, c_m) @ (c_m, 2*c_h), bf16 into the MXU
    ab = jnp.dot(xn.astype(w_ref.dtype), w_ref[...],
                 preferred_element_type=jnp.float32) + bias_ref[...]
    ab = ab * mask
    a_ref[0] = ab[:, :c_h].astype(a_ref.dtype)
    b_ref[0] = ab[:, c_h:].astype(b_ref.dtype)


# --------------------------------------------------------------------------
# Kernel 2: G[(i,c),(j,e)] = sum_s a[s,(i,c)] * b[s,(j,e)]
#   grid = (B, I, J), J innermost; the FULL s extent is inside the block, so
#   there is no accumulator and the A tile is revisited (stays in VMEM) while
#   J sweeps.
# --------------------------------------------------------------------------
def outer_kernel(a_ref, b_ref, g_ref):
    # contract dim 0 (the s dim) of both operands: G = A^T B
    # TODO(synk): verify in the Mosaic dump that this does not emit a per-step
    #             vxpose of the (resident) A tile.
    dn = (((0,), (0,)), ((), ()))
    g_ref[0] = lax.dot_general(a_ref[0], b_ref[0], dn,
                               preferred_element_type=jnp.float32
                               ).astype(g_ref.dtype)


# --------------------------------------------------------------------------
# Kernel 3: linear_out projection + multiply by precomputed 1/(norm+eps).
#   block: g (T3, c_h*c_h), inv (T3, 1) -> out (T3, c_z)
# --------------------------------------------------------------------------
def proj_out_kernel(g_ref, inv_ref, w_ref, bias_ref, o_ref):
    y = jnp.dot(g_ref[0], w_ref[...], preferred_element_type=jnp.float32)
    y = (y + bias_ref[...]) * inv_ref[0]
    o_ref[0] = y.astype(o_ref.dtype)


# --------------------------------------------------------------------------
# Wrapper
# --------------------------------------------------------------------------
def outer_product_mean(m, msa_mask, params, eps=1e-3):
    B, s, r, c_m = m.shape
    c_h = params["wa"].shape[0]
    c_z = params["wo"].shape[0]
    f32 = jnp.float32
    bf16 = jnp.bfloat16

    # fused projection weight / bias, weights in bf16 for the MXU
    w_ab = jnp.concatenate([params["wa"].T, params["wb"].T], axis=1).astype(bf16)
    b_ab = jnp.concatenate([params["ba"], params["bb"]]).reshape(1, 2 * c_h).astype(f32)
    gamma = params["gamma"].reshape(1, c_m).astype(f32)
    beta = params["beta"].reshape(1, c_m).astype(f32)
    wo_t = params["wo"].T.astype(bf16)              # (c_h*c_h, c_z)
    bo = params["bo"].reshape(1, c_z).astype(f32)

    # keep the incoming activation dtype (bf16 inputs stay bf16 for the DMA);
    # the LN math upcasts to f32 inside the kernel.
    m2 = m.reshape(B, s * r, c_m)
    mask2 = msa_mask.reshape(B, s * r, 1)

    # ---- kernel 1: LayerNorm + fused projection + mask (row tiled) ----------
    T1 = _tile(s * r, 1024, 16)                     # 16-aligned: bf16 outputs
    n1 = (s * r) // T1
    a_flat, b_flat = pl.pallas_call(
        functools.partial(ln_proj_kernel, c_h=c_h),
        grid=(B, n1),
        in_specs=[
            pl.BlockSpec((1, T1, c_m), lambda b, t: (b, t, 0)),
            pl.BlockSpec((1, T1, 1), lambda b, t: (b, t, 0)),
            pl.BlockSpec((1, c_m), lambda b, t: (0, 0)),
            pl.BlockSpec((1, c_m), lambda b, t: (0, 0)),
            pl.BlockSpec((c_m, 2 * c_h), lambda b, t: (0, 0)),
            pl.BlockSpec((1, 2 * c_h), lambda b, t: (0, 0)),
        ],
        out_specs=[
            pl.BlockSpec((1, T1, c_h), lambda b, t: (b, t, 0)),
            pl.BlockSpec((1, T1, c_h), lambda b, t: (b, t, 0)),
        ],
        out_shape=[
            jax.ShapeDtypeStruct((B, s * r, c_h), bf16),
            jax.ShapeDtypeStruct((B, s * r, c_h), bf16),
        ],
        compiler_params=pltpu.CompilerParams(
            dimension_semantics=("parallel", "parallel")),
    )(m2, mask2, gamma, beta, w_ab, b_ab)

    # free, row-major-identical relayout: (B, s*r, c_h) == (B, s, r*c_h)
    a2 = a_flat.reshape(B, s, r * c_h)
    b2 = b_flat.reshape(B, s, r * c_h)

    # ---- kernel 2: A-resident GEMM over the full s contraction --------------
    N = r * c_h
    TN = _pick_gemm_tile(N, s, B, budget_bytes=40 << 20)
    nI = N // TN
    k2_need = (4 * s * TN + 2 * TN * TN) * 2
    vmem_lim = int(min(max(k2_need + (4 << 20), 16 << 20), 48 << 20))
    g = pl.pallas_call(
        outer_kernel,
        grid=(B, nI, nI),                           # J innermost -> A revisited
        in_specs=[
            pl.BlockSpec((1, s, TN), lambda b, i, j: (b, 0, i)),
            pl.BlockSpec((1, s, TN), lambda b, i, j: (b, 0, j)),
        ],
        out_specs=pl.BlockSpec((1, TN, TN), lambda b, i, j: (b, i, j)),
        out_shape=jax.ShapeDtypeStruct((B, N, N), bf16),
        compiler_params=pltpu.CompilerParams(
            dimension_semantics=("parallel", "parallel", "parallel"),
            vmem_limit_bytes=vmem_lim),
    )(a2, b2)

    # XLA glue: G[(i,c),(j,e)] -> [(i,j),(c,e)]  (one transpose pass over bf16 G)
    g4 = (g.reshape(B, r, c_h, r, c_h)
            .transpose(0, 1, 3, 2, 4)
            .reshape(B, r * r, c_h * c_h))

    # mask norm: computed once per batch in XLA, stored as a reciprocal
    mask3 = msa_mask.reshape(B, s, r).astype(f32)
    norm = jnp.einsum("bsi,bsj->bij", mask3, mask3)
    inv = (1.0 / (norm + eps)).reshape(B, r * r, 1)

    # ---- kernel 3: output projection + normalization (row tiled) ------------
    T3 = _tile(r * r, 1024, 16)                     # 16-aligned: bf16 g4 input
    n3 = (r * r) // T3
    out_flat = pl.pallas_call(
        proj_out_kernel,
        grid=(B, n3),
        in_specs=[
            pl.BlockSpec((1, T3, c_h * c_h), lambda b, t: (b, t, 0)),
            pl.BlockSpec((1, T3, 1), lambda b, t: (b, t, 0)),
            pl.BlockSpec((c_h * c_h, c_z), lambda b, t: (0, 0)),
            pl.BlockSpec((1, c_z), lambda b, t: (0, 0)),
        ],
        out_specs=pl.BlockSpec((1, T3, c_z), lambda b, t: (b, t, 0)),
        out_shape=jax.ShapeDtypeStruct((B, r * r, c_z), f32),
        compiler_params=pltpu.CompilerParams(
            dimension_semantics=("parallel", "parallel")),
    )(g4, inv, wo_t, bo)

    return out_flat.reshape(B, r, r, c_z)


# --------------------------------------------------------------------------
# Pure-JAX (f32) reference mirroring the PyTorch forward
# --------------------------------------------------------------------------
def reference_forward(m, msa_mask, params, eps):
    mask = msa_mask[..., None]
    mu = m.mean(-1, keepdims=True)
    var = ((m - mu) ** 2).mean(-1, keepdims=True)
    ln = (m - mu) / jnp.sqrt(var + LN_EPS) * params["gamma"] + params["beta"]
    a = (ln @ params["wa"].T + params["ba"]) * mask
    b = (ln @ params["wb"].T + params["bb"]) * mask
    a = jnp.swapaxes(a, -2, -3)
    b = jnp.swapaxes(b, -2, -3)
    outer = jnp.einsum('...bac,...dae->...bdce', a, b)
    outer = outer.reshape(outer.shape[:-2] + (-1,))
    outer = outer @ params["wo"].T + params["bo"]
    norm = jnp.einsum('...abc,...adc->...bdc', mask, mask)
    return outer / (norm + eps)


if __name__ == "__main__":
    B, s, r = 2, 8, 16
    c_m, c_h, c_z = 32, 8, 16
    eps = 1e-3

    key = jax.random.PRNGKey(0)
    ks = jax.random.split(key, 8)
    m = jax.random.normal(ks[0], (B, s, r, c_m), dtype=jnp.float32)
    msa_mask = (jax.random.uniform(ks[1], (B, s, r)) > 0.2).astype(jnp.float32)

    params = dict(
        gamma=jnp.ones((c_m,), jnp.float32),
        beta=jnp.zeros((c_m,), jnp.float32),
        wa=0.1 * jax.random.normal(ks[2], (c_h, c_m), jnp.float32),
        ba=0.1 * jax.random.normal(ks[3], (c_h,), jnp.float32),
        wb=0.1 * jax.random.normal(ks[4], (c_h, c_m), jnp.float32),
        bb=0.1 * jax.random.normal(ks[5], (c_h,), jnp.float32),
        wo=0.1 * jax.random.normal(ks[6], (c_z, c_h * c_h), jnp.float32),
        bo=0.1 * jax.random.normal(ks[7], (c_z,), jnp.float32),
    )

    fn = jax.jit(functools.partial(outer_product_mean, eps=eps))
    out = jax.block_until_ready(fn(m, msa_mask, params))

    ref = reference_forward(m, msa_mask, params, eps)
    assert out.shape == (B, r, r, c_z), out.shape
    # bf16 a/b/G intermediates -> tolerance loosened vs the pure-f32 reference
    err = float(jnp.max(jnp.abs(out - ref)))
    assert jnp.allclose(out, ref, atol=2e-2, rtol=5e-2), f"max err {err}"
    print("KERNEL_OK")
</pallas_src>

<mosaic_0001>
module attributes {stable_mosaic.version = 11 : i64} {
  func.func @outer_kernel(%arg0: i32, %arg1: i32, %arg2: i32, %arg3: memref<1x8x128xbf16, #tpu.memory_space<vmem>>, %arg4: memref<1x8x128xbf16, #tpu.memory_space<vmem>>, %arg5: memref<1x128x128xbf16, #tpu.memory_space<vmem>>) attributes {dimension_semantics = [#tpu.dimension_semantics<parallel>, #tpu.dimension_semantics<parallel>, #tpu.dimension_semantics<parallel>], iteration_bounds = array<i64: 2, 1, 1>, scalar_prefetch = 0 : i64, scratch_operands = 0 : i64, tpu.core_type = #tpu.core_type<tc>, window_params = [{transform_indices = @transform_0, window_bounds = array<i64: 1, 8, 128>}, {transform_indices = @transform_1, window_bounds = array<i64: 1, 8, 128>}, {transform_indices = @transform_2, window_bounds = array<i64: 1, 128, 128>}]} {
    %c0 = arith.constant 0 : index
    %c0_0 = arith.constant 0 : index
    %c0_1 = arith.constant 0 : index
    %0 = vector.load %arg3[%c0, %c0_0, %c0_1] : memref<1x8x128xbf16, #tpu.memory_space<vmem>>, vector<1x8x128xbf16>
    %1 = vector.shape_cast %0 : vector<1x8x128xbf16> to vector<8x128xbf16>
    %c0_2 = arith.constant 0 : index
    %c0_3 = arith.constant 0 : index
    %c0_4 = arith.constant 0 : index
    %2 = vector.load %arg4[%c0_2, %c0_3, %c0_4] : memref<1x8x128xbf16, #tpu.memory_space<vmem>>, vector<1x8x128xbf16>
    %3 = vector.shape_cast %2 : vector<1x8x128xbf16> to vector<8x128xbf16>
    %cst = arith.constant dense<0.000000e+00> : vector<128x128xf32>
    %4 = tpu.matmul %1, %3, %cst {dimension_numbers = #tpu.dot_dimension_numbers<[0], [0], [1], [1], [0, 1, 1, 1], [], []>} : vector<8x128xbf16>, vector<8x128xbf16>, vector<128x128xf32> -> vector<128x128xf32>
    %5 = arith.truncf %4 : vector<128x128xf32> to vector<128x128xbf16>
    %c0_5 = arith.constant 0 : index
    %c0_6 = arith.constant 0 : index
    %c0_7 = arith.constant 0 : index
    %6 = vector.load %arg5[%c0_5, %c0_6, %c0_7] : memref<1x128x128xbf16, #tpu.memory_space<vmem>>, vector<1x128x128xbf16>
    %7 = vector.shape_cast %6 : vector<1x128x128xbf16> to vector<128x128xbf16>
    %8 = vector.shape_cast %5 : vector<128x128xbf16> to vector<1x128x128xbf16>
    tpu.vector_store %arg5[%c0_5, %c0_6, %c0_7], %8 {strides = array<i32>} : memref<1x128x128xbf16, #tpu.memory_space<vmem>>, vector<1x128x128xbf16>,
    return
  }
  func.func @transform_0(%arg0: i32, %arg1: i32, %arg2: i32) -> (i32, i32, i32) {
    %c0_i32 = arith.constant 0 : i32
    %c0_i32_0 = arith.constant 0 : i32
    return %arg0, %c0_i32, %arg1 : i32, i32, i32
  }
  func.func @transform_1(%arg0: i32, %arg1: i32, %arg2: i32) -> (i32, i32, i32) {
    %c0_i32 = arith.constant 0 : i32
    %c0_i32_0 = arith.constant 0 : i32
    return %arg0, %c0_i32, %arg2 : i32, i32, i32
  }
  func.func @transform_2(%arg0: i32, %arg1: i32, %arg2: i32) -> (i32, i32, i32) {
    %c0_i32 = arith.constant 0 : i32
    return %arg0, %arg1, %arg2 : i32, i32, i32
  }
}

module attributes {stable_mosaic.version = 11 : i64} {
  func.func @ln_proj_kernel(%arg0: i32, %arg1: i32, %arg2: memref<1x128x32xf32, #tpu.memory_space<vmem>>, %arg3: memref<1x128x1xf32, #tpu.memory_space<vmem>>, %arg4: memref<1x32xf32, #tpu.memory_space<vmem>>, %arg5: memref<1x32xf32, #tpu.memory_space<vmem>>, %arg6: memref<32x16xbf16, #tpu.memory_space<vmem>>, %arg7: memref<1x16xf32, #tpu.memory_space<vmem>>, %arg8: memref<1x128x8xbf16, #tpu.memory_space<vmem>>, %arg9: memref<1x128x8xbf16, #tpu.memory_space<vmem>>) attributes {dimension_semantics = [#tpu.dimension_semantics<parallel>, #tpu.dimension_semantics<parallel>], iteration_bounds = array<i64: 2, 1>, scalar_prefetch = 0 : i64, scratch_operands = 0 : i64, tpu.core_type = #tpu.core_type<tc>, window_params = [{transform_indices = @transform_0, window_bounds = array<i64: 1, 128, 32>}, {transform_indices = @transform_1, window_bounds = array<i64: 1, 128, 1>}, {pipeline_mode = #tpu.pipeline_mode<synchronous>, transform_indices = @transform_2, window_bounds = array<i64: 1, 32>}, {pipeline_mode = #tpu.pipeline_mode<synchronous>, transform_indices = @transform_3, window_bounds = array<i64: 1, 32>}, {pipeline_mode = #tpu.pipeline_mode<synchronous>, transform_indices = @transform_4, window_bounds = array<i64: 32, 16>}, {pipeline_mode = #tpu.pipeline_mode<synchronous>, transform_indices = @transform_5, window_bounds = array<i64: 1, 16>}, {transform_indices = @transform_6, window_bounds = array<i64: 1, 128, 8>}, {transform_indices = @transform_7, window_bounds = array<i64: 1, 128, 8>}]} {
    %c0 = arith.constant 0 : index
    %c0_0 = arith.constant 0 : index
    %c0_1 = arith.constant 0 : index
    %0 = vector.load %arg2[%c0, %c0_0, %c0_1] : memref<1x128x32xf32, #tpu.memory_space<vmem>>, vector<1x128x32xf32>
    %1 = vector.shape_cast %0 : vector<1x128x32xf32> to vector<128x32xf32>
    %c0_2 = arith.constant 0 : index
    %c0_3 = arith.constant 0 : index
    %c0_4 = arith.constant 0 : index
    %2 = vector.load %arg3[%c0_2, %c0_3, %c0_4] : memref<1x128x1xf32, #tpu.memory_space<vmem>>, vector<1x128x1xf32>
    %3 = vector.shape_cast %2 : vector<1x128x1xf32> to vector<128x1xf32>
    %cst = arith.constant dense<0.000000e+00> : vector<128xf32>
    %4 = vector.multi_reduction <add>, %1, %cst [1] : vector<128x32xf32> to vector<128xf32>
    %5 = vector.shape_cast %4 : vector<128xf32> to vector<128x1xf32>
    %cst_5 = arith.constant 3.200000e+01 : f32
    %6 = vector.broadcast %cst_5 : f32 to vector<128x1xf32>
    %7 = arith.divf %5, %6 : vector<128x1xf32>
    %8 = vector.broadcast %7 : vector<128x1xf32> to vector<128x32xf32>
    %9 = arith.subf %1, %8 : vector<128x32xf32>
    %10 = arith.mulf %9, %9 : vector<128x32xf32>
    %cst_6 = arith.constant dense<0.000000e+00> : vector<128xf32>
    %11 = vector.multi_reduction <add>, %10, %cst_6 [1] : vector<128x32xf32> to vector<128xf32>
    %12 = vector.shape_cast %11 : vector<128xf32> to vector<128x1xf32>
    %cst_7 = arith.constant 3.200000e+01 : f32
    %13 = vector.broadcast %cst_7 : f32 to vector<128x1xf32>
    %14 = arith.divf %12, %13 : vector<128x1xf32>
    %15 = vector.broadcast %7 : vector<128x1xf32> to vector<128x32xf32>
    %16 = arith.subf %1, %15 : vector<128x32xf32>
    %cst_8 = arith.constant 9.99999974E-6 : f32
    %17 = vector.broadcast %cst_8 : f32 to vector<128x1xf32>
    %18 = arith.addf %14, %17 : vector<128x1xf32>
    %19 = math.rsqrt %18 : vector<128x1xf32>
    %20 = vector.broadcast %19 : vector<128x1xf32> to vector<128x32xf32>
    %21 = arith.mulf %16, %20 : vector<128x32xf32>
    %c0_9 = arith.constant 0 : index
    %c0_10 = arith.constant 0 : index
    %22 = vector.load %arg4[%c0_9, %c0_10] : memref<1x32xf32, #tpu.memory_space<vmem>>, vector<1x32xf32>
    %23 = vector.broadcast %22 : vector<1x32xf32> to vector<128x32xf32>
    %24 = arith.mulf %21, %23 : vector<128x32xf32>
    %c0_11 = arith.constant 0 : index
    %c0_12 = arith.constant 0 : index
    %25 = vector.load %arg5[%c0_11, %c0_12] : memref<1x32xf32, #tpu.memory_space<vmem>>, vector<1x32xf32>
    %26 = vector.broadcast %25 : vector<1x32xf32> to vector<128x32xf32>
    %27 = arith.addf %24, %26 : vector<128x32xf32>
    %28 = arith.truncf %27 : vector<128x32xf32> to vector<128x32xbf16>
    %c0_13 = arith.constant 0 : index
    %c0_14 = arith.constant 0 : index
    %29 = vector.load %arg6[%c0_13, %c0_14] : memref<32x16xbf16, #tpu.memory_space<vmem>>, vector<32x16xbf16>
    %cst_15 = arith.constant dense<0.000000e+00> : vector<128x16xf32>
    %30 = tpu.matmul %28, %29, %cst_15 {dimension_numbers = #tpu.dot_dimension_numbers<[1], [0], [0], [1], [0, 0, 1, 1], [], []>} : vector<128x32xbf16>, vector<32x16xbf16>, vector<128x16xf32> -> vector<128x16xf32>
    %c0_16 = arith.constant 0 : index
    %c0_17 = arith.constant 0 : index
    %31 = vector.load %arg7[%c0_16, %c0_17] : memref<1x16xf32, #tpu.memory_space<vmem>>, vector<1x16xf32>
    %32 = vector.broadcast %31 : vector<1x16xf32> to vector<128x16xf32>
    %33 = arith.addf %30, %32 : vector<128x16xf32>
    %34 = vector.broadcast %3 : vector<128x1xf32> to vector<128x16xf32>
    %35 = arith.mulf %33, %34 : vector<128x16xf32>
    %36 = vector.extract_strided_slice %35 {offsets = [0, 0], sizes = [128, 8], strides = [1, 1]} : vector<128x16xf32> to vector<128x8xf32>
    %37 = arith.truncf %36 : vector<128x8xf32> to vector<128x8xbf16>
    %c0_18 = arith.constant 0 : index
    %c0_19 = arith.constant 0 : index
    %c0_20 = arith.constant 0 : index
    %38 = vector.load %arg8[%c0_18, %c0_19, %c0_20] : memref<1x128x8xbf16, #tpu.memory_space<vmem>>, vector<1x128x8xbf16>
    %39 = vector.shape_cast %38 : vector<1x128x8xbf16> to vector<128x8xbf16>
    %40 = vector.shape_cast %37 : vector<128x8xbf16> to vector<1x128x8xbf16>
    tpu.vector_store %arg8[%c0_18, %c0_19, %c0_20], %40 {strides = array<i32>} : memref<1x128x8xbf16, #tpu.memory_space<vmem>>, vector<1x128x8xbf16>,
    %41 = vector.extract_strided_slice %35 {offsets = [0, 8], sizes = [128, 8], strides = [1, 1]} : vector<128x16xf32> to vector<128x8xf32>
    %42 = arith.truncf %41 : vector<128x8xf32> to vector<128x8xbf16>
    %c0_21 = arith.constant 0 : index
    %c0_22 = arith.constant 0 : index
    %c0_23 = arith.constant 0 : index
    %43 = vector.load %arg9[%c0_21, %c0_22, %c0_23] : memref<1x128x8xbf16, #tpu.memory_space<vmem>>, vector<1x128x8xbf16>
    %44 = vector.shape_cast %43 : vector<1x128x8xbf16> to vector<128x8xbf16>
    %45 = vector.shape_cast %42 : vector<128x8xbf16> to vector<1x128x8xbf16>
    tpu.vector_store %arg9[%c0_21, %c0_22, %c0_23], %45 {strides = array<i32>} : memref<1x128x8xbf16, #tpu.memory_space<vmem>>, vector<1x128x8xbf16>,
    return
  }
  func.func @transform_0(%arg0: i32, %arg1: i32) -> (i32, i32, i32) {
    %c0_i32 = arith.constant 0 : i32
    %c0_i32_0 = arith.constant 0 : i32
    return %arg0, %arg1, %c0_i32 : i32, i32, i32
  }
  func.func @transform_1(%arg0: i32, %arg1: i32) -> (i32, i32, i32) {
    %c0_i32 = arith.constant 0 : i32
    %c0_i32_0 = arith.constant 0 : i32
    return %arg0, %arg1, %c0_i32 : i32, i32, i32
  }
  func.func @transform_2(%arg0: i32, %arg1: i32) -> (i32, i32) {
    %c0_i32 = arith.constant 0 : i32
    %c0_i32_0 = arith.constant 0 : i32
    %c0_i32_1 = arith.constant 0 : i32
    return %c0_i32, %c0_i32_0 : i32, i32
  }
  func.func @transform_3(%arg0: i32, %arg1: i32) -> (i32, i32) {
    %c0_i32 = arith.constant 0 : i32
    %c0_i32_0 = arith.constant 0 : i32
    %c0_i32_1 = arith.constant 0 : i32
    return %c0_i32, %c0_i32_0 : i32, i32
  }
  func.func @transform_4(%arg0: i32, %arg1: i32) -> (i32, i32) {
    %c0_i32 = arith.constant 0 : i32
    %c0_i32_0 = arith.constant 0 : i32
    %c0_i32_1 = arith.constant 0 : i32
    return %c0_i32, %c0_i32_0 : i32, i32
  }
  func.func @transform_5(%arg0: i32, %arg1: i32) -> (i32, i32) {
    %c0_i32 = arith.constant 0 : i32
    %c0_i32_0 = arith.constant 0 : i32
    %c0_i32_1 = arith.constant 0 : i32
    return %c0_i32, %c0_i32_0 : i32, i32
  }
  func.func @transform_6(%arg0: i32, %arg1: i32) -> (i32, i32, i32) {
    %c0_i32 = arith.constant 0 : i32
    %c0_i32_0 = arith.constant 0 : i32
    return %arg0, %arg1, %c0_i32 : i32, i32, i32
  }
  func.func @transform_7(%arg0: i32, %arg1: i32) -> (i32, i32, i32) {
    %c0_i32 = arith.constant 0 : i32
    %c0_i32_0 = arith.constant 0 : i32
    return %arg0, %arg1, %c0_i32 : i32, i32, i32
  }
}

module attributes {stable_mosaic.version = 11 : i64} {
  func.func @proj_out_kernel(%arg0: i32, %arg1: i32, %arg2: memref<1x256x64xbf16, #tpu.memory_space<vmem>>, %arg3: memref<1x256x1xf32, #tpu.memory_space<vmem>>, %arg4: memref<64x16xbf16, #tpu.memory_space<vmem>>, %arg5: memref<1x16xf32, #tpu.memory_space<vmem>>, %arg6: memref<1x256x16xf32, #tpu.memory_space<vmem>>) attributes {dimension_semantics = [#tpu.dimension_semantics<parallel>, #tpu.dimension_semantics<parallel>], iteration_bounds = array<i64: 2, 1>, scalar_prefetch = 0 : i64, scratch_operands = 0 : i64, tpu.core_type = #tpu.core_type<tc>, window_params = [{transform_indices = @transform_0, window_bounds = array<i64: 1, 256, 64>}, {transform_indices = @transform_1, window_bounds = array<i64: 1, 256, 1>}, {pipeline_mode = #tpu.pipeline_mode<synchronous>, transform_indices = @transform_2, window_bounds = array<i64: 64, 16>}, {pipeline_mode = #tpu.pipeline_mode<synchronous>, transform_indices = @transform_3, window_bounds = array<i64: 1, 16>}, {transform_indices = @transform_4, window_bounds = array<i64: 1, 256, 16>}]} {
    %c0 = arith.constant 0 : index
    %c0_0 = arith.constant 0 : index
    %c0_1 = arith.constant 0 : index
    %0 = vector.load %arg2[%c0, %c0_0, %c0_1] : memref<1x256x64xbf16, #tpu.memory_space<vmem>>, vector<1x256x64xbf16>
    %1 = vector.shape_cast %0 : vector<1x256x64xbf16> to vector<256x64xbf16>
    %c0_2 = arith.constant 0 : index
    %c0_3 = arith.constant 0 : index
    %2 = vector.load %arg4[%c0_2, %c0_3] : memref<64x16xbf16, #tpu.memory_space<vmem>>, vector<64x16xbf16>
    %cst = arith.constant dense<0.000000e+00> : vector<256x16xf32>
    %3 = tpu.matmul %1, %2, %cst {dimension_numbers = #tpu.dot_dimension_numbers<[1], [0], [0], [1], [0, 0, 1, 1], [], []>} : vector<256x64xbf16>, vector<64x16xbf16>, vector<256x16xf32> -> vector<256x16xf32>
    %c0_4 = arith.constant 0 : index
    %c0_5 = arith.constant 0 : index
    %4 = vector.load %arg5[%c0_4, %c0_5] : memref<1x16xf32, #tpu.memory_space<vmem>>, vector<1x16xf32>
    %5 = vector.broadcast %4 : vector<1x16xf32> to vector<256x16xf32>
    %6 = arith.addf %3, %5 : vector<256x16xf32>
    %c0_6 = arith.constant 0 : index
    %c0_7 = arith.constant 0 : index
    %c0_8 = arith.constant 0 : index
    %7 = vector.load %arg3[%c0_6, %c0_7, %c0_8] : memref<1x256x1xf32, #tpu.memory_space<vmem>>, vector<1x256x1xf32>
    %8 = vector.shape_cast %7 : vector<1x256x1xf32> to vector<256x1xf32>
    %9 = vector.broadcast %8 : vector<256x1xf32> to vector<256x16xf32>
    %10 = arith.mulf %6, %9 : vector<256x16xf32>
    %c0_9 = arith.constant 0 : index
    %c0_10 = arith.constant 0 : index
    %c0_11 = arith.constant 0 : index
    %11 = vector.load %arg6[%c0_9, %c0_10, %c0_11] : memref<1x256x16xf32, #tpu.memory_space<vmem>>, vector<1x256x16xf32>
    %12 = vector.shape_cast %11 : vector<1x256x16xf32> to vector<256x16xf32>
    %13 = vector.shape_cast %10 : vector<256x16xf32> to vector<1x256x16xf32>
    tpu.vector_store %arg6[%c0_9, %c0_10, %c0_11], %13 {strides = array<i32>} : memref<1x256x16xf32, #tpu.memory_space<vmem>>, vector<1x256x16xf32>,
    return
  }
  func.func @transform_0(%arg0: i32, %arg1: i32) -> (i32, i32, i32) {
    %c0_i32 = arith.constant 0 : i32
    %c0_i32_0 = arith.constant 0 : i32
    return %arg0, %arg1, %c0_i32 : i32, i32, i32
  }
  func.func @transform_1(%arg0: i32, %arg1: i32) -> (i32, i32, i32) {
    %c0_i32 = arith.constant 0 : i32
    %c0_i32_0 = arith.constant 0 : i32
    return %arg0, %arg1, %c0_i32 : i32, i32, i32
  }
  func.func @transform_2(%arg0: i32, %arg1: i32) -> (i32, i32) {
    %c0_i32 = arith.constant 0 : i32
    %c0_i32_0 = arith.constant 0 : i32
    %c0_i32_1 = arith.constant 0 : i32
    return %c0_i32, %c0_i32_0 : i32, i32
  }
  func.func @transform_3(%arg0: i32, %arg1: i32) -> (i32, i32) {
    %c0_i32 = arith.constant 0 : i32
    %c0_i32_0 = arith.constant 0 : i32
    %c0_i32_1 = arith.constant 0 : i32
    return %c0_i32, %c0_i32_0 : i32, i32
  }
  func.func @transform_4(%arg0: i32, %arg1: i32) -> (i32, i32, i32) {
    %c0_i32 = arith.constant 0 : i32
    %c0_i32_0 = arith.constant 0 : i32
    return %arg0, %arg1, %c0_i32 : i32, i32, i32
  }
}

</mosaic_0001>

<llo_original>
// kernel: outer_product_mean.4
$region0: #{outer_product_mean.4}
  #allocation0 [shape = 'u32[]', space=smem, size = 0x4, offset = 0x4, fixed_abs, tag = 'smem constant byte address 0x4 - core index']
  #allocation1 [shape = 'u32[144,128]{1,0:T(1,128)}', space=vmem, size = 0x12000, scoped, tag = 'internal scratch']
  %s0 = inlined_call_operand.vmem [shape: bf16[2,8,128], index: 0, kind: input, shape index: {}]
  %s1 = inlined_call_operand.vmem [shape: bf16[2,8,128], index: 1, kind: input, shape index: {}]
  %s2 = inlined_call_operand.vmem [shape: bf16[2,128,128], index: 2, kind: output, shape index: {}]
  %s3 = sld [smem:[#allocation0]]
  $region41: #{outer_product_mean.4} parent=0
    _
  %s5 = ssub.s32 1, %s3
  %s6 = scalar_select 0, %s5, %s3
  loop: start=0, step=1, limit=4
  $region2: #{outer_product_mean.4} parent=0 // loop_pre_header
    _
  $region3: #{outer_product_mean.4} parent=0 // loop_header
    %s8 = sphi 0, %s12
    %p9 = scmp.ge.s32.totalorder %s8, 4
    %s15 = sphi 0, %s34
    %s16 = sphi 0, %s30
    %s17 = sphi 0, %s26
    %s18 = sphi 0, %s15
    %s19 = sphi 0, %s16
    %s20 = sphi 0, %s17
    %s21 = sphi 0, %s18
    %s22 = sphi 0, %s19
    %s23 = sphi 0, %s20
    %s39 = sphi 0, %s41
    %s42 = sphi 0, %s39
    %s43 = sphi 0, %s42
    %s59 = sphi 0, %s43
    %s67 = sphi 0, %s69
    %s70 = sphi 0, %s67
    %s71 = sphi 0, %s70
    %s87 = sphi 0, %s71
    %s97 = sphi 0, %s99
    %s100 = sphi 0, %s97
    %s101 = sphi 0, %s100
    %s117 = sphi 0, %s101
  $region4: #{outer_product_mean.4} parent=0 // loop_header_branch
    %11 = sbr.rel (%p9) target = $region8
  $region5: #{outer_product_mean.4} parent=0 // loop_body
    %s13 = ssub.s32 %s8, 1
    %s14 = ssub.s32 %s8, 2
    %s24 = sadd.s32 1, %s17
    %p25 = scmp.ge.s32.totalorder %s24, 1
    %s26 = scalar_select %p25, 0, %s24
    %s27 = sadd.s32 1, %s16
    %s28 = scalar_select %p25, %s27, %s16
    %p29 = scmp.ge.s32.totalorder %s28, 1
    %s30 = scalar_select %p29, 0, %s28
    %s31 = sadd.s32 1, %s15
    %s32 = scalar_select %p29, %s31, %s15
    %p33 = scmp.ge.s32.totalorder %s32, 2
    %s34 = scalar_select %p33, 0, %s32
    %s35 = ssub.s32 %s15, %s34
    %s36 = ssub.s32 %s16, %s30
    %s37 = sor.u32 %s35, %s36
    %p38 = scmp.eq.s32.totalorder %s37, 0
    %s40 = sadd.s32 %s39, 1
    %s41 = scalar_select %p38, %s39, %s40
    %p44 = pneg %p38
    %p45 = scmp.eq.s32.totalorder %s8, 1
    %p46 = por %p44, %p45
    %p47 = scmp.ne.s32.totalorder %s39, %s42
    %p48 = scmp.eq.s32.totalorder %s8, 0
    %p49 = por %p47, %p48
    %p50 = scmp.ne.s32.totalorder %s39, %s42
    %p51 = scmp.eq.s32.totalorder %s13, 1
    %p52 = por %p50, %p51
    %p53 = scmp.ne.s32.totalorder %s42, %s43
    %p54 = scmp.eq.s32.totalorder %s13, 0
    %p55 = por %p53, %p54
    %p56 = scmp.ne.s32.totalorder %s42, %s43
    %p57 = scmp.eq.s32.totalorder %s14, 1
    %p58 = por %p56, %p57
    %p60 = scmp.ne.s32.totalorder %s43, %s59
    %p61 = scmp.eq.s32.totalorder %s14, 0
    %p62 = por %p60, %p61
    %s63 = ssub.s32 %s15, %s34
    %s64 = ssub.s32 %s17, %s26
    %s65 = sor.u32 %s63, %s64
    %p66 = scmp.eq.s32.totalorder %s65, 0
    %s68 = sadd.s32 %s67, 1
    %s69 = scalar_select %p66, %s67, %s68
    %p72 = pneg %p66
    %p73 = scmp.eq.s32.totalorder %s8, 1
    %p74 = por %p72, %p73
    %p75 = scmp.ne.s32.totalorder %s67, %s70
    %p76 = scmp.eq.s32.totalorder %s8, 0
    %p77 = por %p75, %p76
    %p78 = scmp.ne.s32.totalorder %s67, %s70
    %p79 = scmp.eq.s32.totalorder %s13, 1
    %p80 = por %p78, %p79
    %p81 = scmp.ne.s32.totalorder %s70, %s71
    %p82 = scmp.eq.s32.totalorder %s13, 0
    %p83 = por %p81, %p82
    %p84 = scmp.ne.s32.totalorder %s70, %s71
    %p85 = scmp.eq.s32.totalorder %s14, 1
    %p86 = por %p84, %p85
    %p88 = scmp.ne.s32.totalorder %s71, %s87
    %p89 = scmp.eq.s32.totalorder %s14, 0
    %p90 = por %p88, %p89
    %s91 = ssub.s32 %s15, %s34
    %s92 = ssub.s32 %s16, %s30
    %s93 = sor.u32 %s91, %s92
    %s94 = ssub.s32 %s17, %s26
    %s95 = sor.u32 %s93, %s94
    %p96 = scmp.eq.s32.totalorder %s95, 0
    %s98 = sadd.s32 %s97, 1
    %s99 = scalar_select %p96, %s97, %s98
    %p102 = pneg %p96
    %p103 = scmp.eq.s32.totalorder %s8, 1
    %p104 = por %p102, %p103
    %p105 = scmp.ne.s32.totalorder %s97, %s100
    %p106 = scmp.eq.s32.totalorder %s8, 0
    %p107 = por %p105, %p106
    %p108 = scmp.ne.s32.totalorder %s97, %s100
    %p109 = scmp.eq.s32.totalorder %s13, 1
    %p110 = por %p108, %p109
    %p111 = scmp.ne.s32.totalorder %s100, %s101
    %p112 = scmp.eq.s32.totalorder %s13, 0
    %p113 = por %p111, %p112
    %p114 = scmp.ne.s32.totalorder %s100, %s101
    %p115 = scmp.eq.s32.totalorder %s14, 1
    %p116 = por %p114, %p115
    %p118 = scmp.ne.s32.totalorder %s101, %s117
    %p119 = scmp.eq.s32.totalorder %s14, 0
    %p120 = por %p118, %p119
    %p121 = scmp.le.s32.totalorder 1, %s8
    %p122 = scmp.lt.s32.totalorder %s8, 3
    %p123 = pnand %p121, %p122
    %p124 = pneg %p123
    // Predicated region
    $region9: #{outer_product_mean.4} parent=5 // pred_check
      _
    $region10: #{outer_product_mean.4} parent=5 // pred_check_branch
      %126 = sbr.rel (%p123) target = $region12
    $region11: #{outer_product_mean.4} parent=5 // pred_region
      %s127 = ssub.s32 %s8, 1
    $region12: #{outer_product_mean.4} parent=5 // pred_fallthru
      _
    %p128 = scmp.lt.s32.totalorder %s8, 2
    // Predicated region
    $region13: #{outer_product_mean.4} parent=5 // pred_check
      %p129 = pneg %p128
    $region14: #{outer_product_mean.4} parent=5 // pred_check_branch
      %131 = sbr.rel (%p129) target = $region16
    $region15: #{outer_product_mean.4} parent=5 // pred_region
      // Predicated region
      $region17: #{outer_product_mean.4} parent=15 // pred_check
        %p132 = pneg %p49
      $region18: #{outer_product_mean.4} parent=15 // pred_check_branch
        %134 = sbr.rel (%p132) target = $region20
      $region19: #{outer_product_mean.4} parent=15 // pred_region
        %p135 = scmp.lt.s32.totalorder %s15, 1
        %s136 = scalar_select %p135, %s15, 1
        %p137 = scmp.lt.s32.totalorder %s16, 0
        %s138 = scalar_select %p137, %s16, 0
        %s139 = sadd.s32 %s138, %s136
        %s140 = smul.addr %s139, 4
        %s141 = scalar_lea.vmem %s0, %s140
      $region20: #{outer_product_mean.4} parent=15 // pred_fallthru
        _
      // Predicated region
      $region21: #{outer_product_mean.4} parent=15 // pred_check
        %p142 = pneg %p77
      $region22: #{outer_product_mean.4} parent=15 // pred_check_branch
        %144 = sbr.rel (%p142) target = $region24
      $region23: #{outer_product_mean.4} parent=15 // pred_region
        %p145 = scmp.lt.s32.totalorder %s15, 1
        %s146 = scalar_select %p145, %s15, 1
        %p147 = scmp.lt.s32.totalorder %s17, 0
        %s148 = scalar_select %p147, %s17, 0
        %s149 = sadd.s32 %s148, %s146
        %s150 = smul.addr %s149, 4
        %s151 = scalar_lea.vmem %s1, %s150
      $region24: #{outer_product_mean.4} parent=15 // pred_fallthru
        _
    $region16: #{outer_product_mean.4} parent=5 // pred_fallthru
      _
    %p152 = scmp.le.s32.totalorder 1, %s8
    %p153 = scmp.lt.s32.totalorder %s8, 3
    %p154 = pnand %p152, %p153
    %p155 = pneg %p154
    // Predicated region
    $region25: #{outer_product_mean.4} parent=5 // pred_check
      _
    $region26: #{outer_product_mean.4} parent=5 // pred_check_branch
      %157 = sbr.rel (%p154) target = $region28
    $region27: #{outer_product_mean.4} parent=5 // pred_region
      %s158 = ssub.s32 %s8, 1
      %p159 = scmp.lt.s32.totalorder %s18, 1
      %s160 = scalar_select %p159, %s18, 1
      %p161 = scmp.lt.s32.totalorder %s19, 0
      %s162 = scalar_select %p161, %s19, 0
      %s163 = sadd.s32 %s162, %s160
      %s164 = smul.addr %s163, 4
      %s165 = scalar_lea.vmem %s0, %s164
      %p166 = pneg %p55
      %p167 = pneg %p52
      %p168 = scmp.lt.s32.totalorder %s18, 1
      %s169 = scalar_select %p168, %s18, 1
      %p170 = scmp.lt.s32.totalorder %s20, 0
      %s171 = scalar_select %p170, %s20, 0
      %s172 = sadd.s32 %s171, %s169
      %s173 = smul.addr %s172, 4
      %s174 = scalar_lea.vmem %s1, %s173
      %p175 = pneg %p83
      %p176 = pneg %p80
      %p177 = pneg %p113
      %p178 = pneg %p110
      %s179 = smul.u32 16, %s19
      %p180 = scmp.lt.s32.totalorder %s18, 1
      %s181 = scalar_select %p180, %s18, 1
      %p182 = scmp.lt.s32.totalorder %s179, 15
      %s183 = scalar_select %p182, %s179, 15
      %p184 = scmp.lt.s32.totalorder %s20, 0
      %s185 = scalar_select %p184, %s20, 0
      %s186 = sadd.s32 %s185, %s183
      %s187 = smul.addr %s181, 16
      %s188 = sadd.s32 %s186, %s187
      %s189 = smul.addr %s188, 4
      %s190 = scalar_lea.vmem %s2, %s189
      %p191 = scmp.lt.s32.totalorder %s18, 1
      %s192 = scalar_select %p191, %s18, 1
      %p193 = scmp.lt.s32.totalorder %s19, 0
      %s194 = scalar_select %p193, %s19, 0
      %s195 = sadd.s32 %s194, %s192
      %s196 = smul.addr %s195, 4
      %s197 = scalar_lea.vmem %s0, %s196
      %p198 = scmp.lt.s32.totalorder %s18, 1
      %s199 = scalar_select %p198, %s18, 1
      %p200 = scmp.lt.s32.totalorder %s20, 0
      %s201 = scalar_select %p200, %s20, 0
      %s202 = sadd.s32 %s201, %s199
      %s203 = smul.addr %s202, 4
      %s204 = scalar_lea.vmem %s1, %s203
      %s205 = smul.u32 16, %s19
      %p206 = scmp.lt.s32.totalorder %s18, 1
      %s207 = scalar_select %p206, %s18, 1
      %p208 = scmp.lt.s32.totalorder %s205, 15
      %s209 = scalar_select %p208, %s205, 15
      %p210 = scmp.lt.s32.totalorder %s20, 0
      %s211 = scalar_select %p210, %s20, 0
      %s212 = sadd.s32 %s211, %s209
      %s213 = smul.addr %s207, 16
      %s214 = sadd.s32 %s212, %s213
      %s215 = smul.addr %s214, 4
      %s216 = scalar_lea.vmem %s2, %s215
      %s217 = smul.u32 16, %s19
      %v219 = vld [vmem:[%s197] sm:$0xf]
      %v220 = vld [vmem:[%s204] sm:$0xf]
      %221 = vxpose.xlu0.c.b16.start [1/8] %v219, 128
      %222 = vxpose.xlu0.c.b16.cont [2/8] 0, 128
      %223 = vxpose.xlu0.c.b16.cont [3/8] 0, 128
      %224 = vxpose.xlu0.c.b16.cont [4/8] 0, 128
      %225 = vxpose.xlu0.c.b16.cont [5/8] 0, 128
      %226 = vxpose.xlu0.c.b16.cont [6/8] 0, 128
      %227 = vxpose.xlu0.c.b16.cont [7/8] 0, 128
      %228 = vxpose.xlu0.c.b16.end [8/8] 0, 128
      %v229 = vpop.trf.xlu0
      %v230 = vpop.trf.xlu0
      %v231 = vpop.trf.xlu0
      %v232 = vpop.trf.xlu0
      %v233 = vpop.trf.xlu0
      %v234 = vpop.trf.xlu0
      %v235 = vpop.trf.xlu0
      %v236 = vpop.trf.xlu0
      %vm237 = vcmask 64512
      %v239 = vsel %vm237, %v229, 0
      %v242 = vsel %vm237, %v230, 0
      %v245 = vsel %vm237, %v231, 0
      %v248 = vsel %vm237, %v232, 0
      %v251 = vsel %vm237, %v233, 0
      %v254 = vsel %vm237, %v234, 0
      %v257 = vsel %vm237, %v235, 0
      %v260 = vsel %vm237, %v236, 0
      %vm262 = vcmask 1043456
      %v264 = vsel %vm262, %v220, 0
      %266 = vmatprep.subr.bf16.mxu0 0
      %267 = vmatpush1.bf16.msra.mxu0 %v264
      %268 = vmatprep.subr.bf16.mxu0 0
      %269 = vmatpush1.bf16.msra.mxu0 0
      %270 = vmatprep.subr.bf16.mxu0 0
      %271 = vmatpush1.bf16.msra.mxu0 0
      %272 = vmatprep.subr.bf16.mxu0 0
      %273 = vmatpush1.bf16.msra.mxu0 0
      %274 = vmatprep.subr.bf16.mxu0 0
      %275 = vmatpush1.bf16.msra.mxu0 0
      %276 = vmatprep.subr.bf16.mxu0 0
      %277 = vmatpush1.bf16.msra.mxu0 0
      %278 = vmatprep.subr.bf16.mxu0 0
      %279 = vmatpush1.bf16.msra.mxu0 0
      %280 = vmatprep.subr.bf16.mxu0 0
      %281 = vmatpush1.bf16.msra.mxu0 0
      %282 = vmatprep.subr.bf16.mxu0 0
      %283 = vmatpush1.bf16.msra.mxu0 0
      %284 = vmatprep.subr.bf16.mxu0 0
      %285 = vmatpush1.bf16.msra.mxu0 0
      %286 = vmatprep.subr.bf16.mxu0 0
      %287 = vmatpush1.bf16.msra.mxu0 0
      %288 = vmatprep.subr.bf16.mxu0 0
      %289 = vmatpush1.bf16.msra.mxu0 0
      %290 = vmatprep.subr.bf16.mxu0 0
      %291 = vmatpush1.bf16.msra.mxu0 0
      %292 = vmatprep.subr.bf16.mxu0 0
      %293 = vmatpush1.bf16.msra.mxu0 0
      %294 = vmatprep.subr.bf16.mxu0 0
      %295 = vmatpush1.bf16.msra.mxu0 0
      %296 = vmatprep.subr.bf16.mxu0 0
      %297 = vmatpush1.bf16.msra.mxu0 0
      %298 = vmatprep.mubr.bf16.mxu0 0
      %299 = vmatmul.mubr.bf16.gmra.mrb[0].mxu0 %v239
      %v300 = vpop.f32.mrb[0].mxu0
      %v301 = vadd.f32 0.0, %v300
      %v302 = vpop.f32.mrb[0].mxu0
      %v303 = vpop.f32.mrb[0].mxu0
      %v304 = vadd.f32 0.0, %v303
      %v305 = vpop.f32.mrb[0].mxu0
      %306 = vmatprep.mubr.bf16.mxu0 0
      %307 = vmatmul.mubr.bf16.gmra.mrb[0].mxu0 %v242
      %v308 = vpop.f32.mrb[0].mxu0
      %v309 = vadd.f32 0.0, %v308
      %v310 = vpop.f32.mrb[0].mxu0
      %v311 = vpop.f32.mrb[0].mxu0
      %v312 = vadd.f32 0.0, %v311
      %v313 = vpop.f32.mrb[0].mxu0
      %314 = vmatprep.mubr.bf16.mxu0 0
      %315 = vmatmul.mubr.bf16.gmra.mrb[0].mxu0 %v245
      %v316 = vpop.f32.mrb[0].mxu0
      %v317 = vadd.f32 0.0, %v316
      %v318 = vpop.f32.mrb[0].mxu0
      %v319 = vpop.f32.mrb[0].mxu0
      %v320 = vadd.f32 0.0, %v319
      %v321 = vpop.f32.mrb[0].mxu0
      %322 = vmatprep.mubr.bf16.mxu0 0
      %323 = vmatmul.mubr.bf16.gmra.mrb[0].mxu0 %v248
      %v324 = vpop.f32.mrb[0].mxu0
      %v325 = vadd.f32 0.0, %v324
      %v326 = vpop.f32.mrb[0].mxu0
      %v327 = vpop.f32.mrb[0].mxu0
      %v328 = vadd.f32 0.0, %v327
      %v329 = vpop.f32.mrb[0].mxu0
      %330 = vmatprep.mubr.bf16.mxu0 0
      %331 = vmatmul.mubr.bf16.gmra.mrb[0].mxu0 %v251
      %v332 = vpop.f32.mrb[0].mxu0
      %v333 = vadd.f32 0.0, %v332
      %v334 = vpop.f32.mrb[0].mxu0
      %v335 = vpop.f32.mrb[0].mxu0
      %v336 = vadd.f32 0.0, %v335
      %v337 = vpop.f32.mrb[0].mxu0
      %338 = vmatprep.mubr.bf16.mxu0 0
      %339 = vmatmul.mubr.bf16.gmra.mrb[0].mxu0 %v254
      %v340 = vpop.f32.mrb[0].mxu0
      %v341 = vadd.f32 0.0, %v340
      %v342 = vpop.f32.mrb[0].mxu0
      %v343 = vpop.f32.mrb[0].mxu0
      %v344 = vadd.f32 0.0, %v343
      %v345 = vpop.f32.mrb[0].mxu0
      %346 = vmatprep.mubr.bf16.mxu0 0
      %347 = vmatmul.mubr.bf16.gmra.mrb[0].mxu0 %v257
      %v348 = vpop.f32.mrb[0].mxu0
      %v349 = vadd.f32 0.0, %v348
      %v350 = vpop.f32.mrb[0].mxu0
      %v351 = vpop.f32.mrb[0].mxu0
      %v352 = vadd.f32 0.0, %v351
      %v353 = vpop.f32.mrb[0].mxu0
      %354 = vmatprep.mubr.bf16.mxu0 0
      %355 = vmatmul.mubr.bf16.gmra.mrb[0].mxu0 %v260
      %v356 = vpop.f32.mrb[0].mxu0
      %v357 = vadd.f32 0.0, %v356
      %v358 = vpop.f32.mrb[0].mxu0
      %v359 = vpop.f32.mrb[0].mxu0
      %v360 = vadd.f32 0.0, %v359
      %v361 = vpop.f32.mrb[0].mxu0
      %362 = vdwg.mxu0
      %v363 = vpack.c.bf16 %v304, %v301
      %v364 = vpack.c.bf16 %v312, %v309
      %v365 = vpack.c.bf16 %v320, %v317
      %v366 = vpack.c.bf16 %v328, %v325
      %v367 = vpack.c.bf16 %v336, %v333
      %v368 = vpack.c.bf16 %v344, %v341
      %v369 = vpack.c.bf16 %v352, %v349
      %v370 = vpack.c.bf16 %v360, %v357
      %v379 = vunpack.c.l.b16 %v363
      %v380 = vunpack.c.h.b16 %v363
      %v381 = vunpack.c.l.b16 %v364
      %v382 = vunpack.c.h.b16 %v364
      %v383 = vunpack.c.l.b16 %v365
      %v384 = vunpack.c.h.b16 %v365
      %v385 = vunpack.c.l.b16 %v366
      %v386 = vunpack.c.h.b16 %v366
      %v387 = vunpack.c.l.b16 %v367
      %v388 = vunpack.c.h.b16 %v367
      %v389 = vunpack.c.l.b16 %v368
      %v390 = vunpack.c.h.b16 %v368
      %v391 = vunpack.c.l.b16 %v369
      %v392 = vunpack.c.h.b16 %v369
      %v393 = vunpack.c.l.b16 %v370
      %v394 = vunpack.c.h.b16 %v370
      %v395 = vpack.c.b16 %v379, %v379
      %v396 = vpack.c.b16 %v380, %v380
      %v397 = vpack.c.b16 %v381, %v381
      %v398 = vpack.c.b16 %v382, %v382
      %v399 = vpack.c.b16 %v383, %v383
      %v400 = vpack.c.b16 %v384, %v384
      %v401 = vpack.c.b16 %v385, %v385
      %v402 = vpack.c.b16 %v386, %v386
      %v403 = vpack.c.b16 %v387, %v387
      %v404 = vpack.c.b16 %v388, %v388
      %v405 = vpack.c.b16 %v389, %v389
      %v406 = vpack.c.b16 %v390, %v390
      %v407 = vpack.c.b16 %v391, %v391
      %v408 = vpack.c.b16 %v392, %v392
      %v409 = vpack.c.b16 %v393, %v393
      %v410 = vpack.c.b16 %v394, %v394
      %427 = vst [vmem:[%s216] sm:$0xf] %v395
      %428 = vst [vmem:[%s216 + $0x4] sm:$0xf] %v396
      %429 = vst [vmem:[%s216 + $0x8] sm:$0xf] %v397
      %430 = vst [vmem:[%s216 + $0xc] sm:$0xf] %v398
      %431 = vst [vmem:[%s216 + $0x10] sm:$0xf] %v399
      %432 = vst [vmem:[%s216 + $0x14] sm:$0xf] %v400
      %433 = vst [vmem:[%s216 + $0x18] sm:$0xf] %v401
      %434 = vst [vmem:[%s216 + $0x1c] sm:$0xf] %v402
      %435 = vst [vmem:[%s216 + $0x20] sm:$0xf] %v403
      %436 = vst [vmem:[%s216 + $0x24] sm:$0xf] %v404
      %437 = vst [vmem:[%s216 + $0x28] sm:$0xf] %v405
      %438 = vst [vmem:[%s216 + $0x2c] sm:$0xf] %v406
      %439 = vst [vmem:[%s216 + $0x30] sm:$0xf] %v407
      %440 = vst [vmem:[%s216 + $0x34] sm:$0xf] %v408
      %441 = vst [vmem:[%s216 + $0x38] sm:$0xf] %v409
      %442 = vst [vmem:[%s216 + $0x3c] sm:$0xf] %v410
      %s443 = smul.u32 16, %s19
      %p444 = scmp.lt.s32.totalorder %s18, 1
      %s445 = scalar_select %p444, %s18, 1
      %p446 = scmp.lt.s32.totalorder %s443, 15
      %s447 = scalar_select %p446, %s443, 15
      %p448 = scmp.lt.s32.totalorder %s20, 0
      %s449 = scalar_select %p448, %s20, 0
      %s450 = sadd.s32 %s449, %s447
      %s451 = smul.addr %s445, 16
      %s452 = sadd.s32 %s450, %s451
      %s453 = smul.addr %s452, 4
      %s454 = scalar_lea.vmem %s2, %s453
      // Predicated region
      $region29: #{outer_product_mean.4} parent=27 // pred_check
        %p455 = pneg %p110
      $region30: #{outer_product_mean.4} parent=27 // pred_check_branch
        %457 = sbr.rel (%p455) target = $region32
      $region31: #{outer_product_mean.4} parent=27 // pred_region
        %s458 = smul.u32 16, %s19
      $region32: #{outer_product_mean.4} parent=27 // pred_fallthru
        _
    $region28: #{outer_product_mean.4} parent=5 // pred_fallthru
      _
    %p459 = scmp.le.s32.totalorder 2, %s8
    // Predicated region
    $region33: #{outer_product_mean.4} parent=5 // pred_check
      %p460 = pneg %p459
    $region34: #{outer_product_mean.4} parent=5 // pred_check_branch
      %462 = sbr.rel (%p460) target = $region36
    $region35: #{outer_product_mean.4} parent=5 // pred_region
      %s463 = ssub.s32 %s8, 2
      // Predicated region
      $region37: #{outer_product_mean.4} parent=35 // pred_check
        %p464 = pneg %p116
      $region38: #{outer_product_mean.4} parent=35 // pred_check_branch
        %466 = sbr.rel (%p464) target = $region40
      $region39: #{outer_product_mean.4} parent=35 // pred_region
        %s467 = smul.u32 16, %s22
        %p468 = scmp.lt.s32.totalorder %s21, 1
        %s469 = scalar_select %p468, %s21, 1
        %p470 = scmp.lt.s32.totalorder %s467, 15
        %s471 = scalar_select %p470, %s467, 15
        %p472 = scmp.lt.s32.totalorder %s23, 0
        %s473 = scalar_select %p472, %s23, 0
        %s474 = sadd.s32 %s473, %s471
        %s475 = smul.addr %s469, 16
        %s476 = sadd.s32 %s474, %s475
        %s477 = smul.addr %s476, 4
        %s478 = scalar_lea.vmem %s2, %s477
      $region40: #{outer_product_mean.4} parent=35 // pred_fallthru
        _
    $region36: #{outer_product_mean.4} parent=5 // pred_fallthru
      _
  $region6: #{outer_product_mean.4} parent=0 // loop_footer
    %s12 = sadd.s32 1, %s8
  $region7: #{outer_product_mean.4} parent=0 // loop_footer_branch
    %7 = sbr.rel target = $region3
  $region8: #{outer_product_mean.4} parent=0 // loop_exit
    _

// kernel: outer_product_mean.3
$region0: #{outer_product_mean.3}
  #allocation0 [shape = 'u32[]', space=smem, size = 0x4, offset = 0x4, fixed_abs, tag = 'smem constant byte address 0x4 - core index']
  #allocation1 [shape = 'u32[144,128]{1,0:T(1,128)}', space=vmem, size = 0x12000, scoped, tag = 'internal scratch']
  %s0 = inlined_call_operand.vmem [shape: f32[2,128,32], index: 0, kind: input, shape index: {}]
  %s1 = inlined_call_operand.vmem [shape: f32[2,128,1], index: 1, kind: input, shape index: {}]
  %s2 = inlined_call_operand.vmem [shape: f32[1,32], index: 2, kind: input, shape index: {}]
  %s3 = inlined_call_operand.vmem [shape: f32[1,32], index: 3, kind: input, shape index: {}]
  %s4 = inlined_call_operand.vmem [shape: bf16[32,16], index: 4, kind: input, shape index: {}]
  %s5 = inlined_call_operand.vmem [shape: f32[1,16], index: 5, kind: input, shape index: {}]
  %s6 = inlined_call_operand.vmem [shape: bf16[2,128,8], index: 6, kind: output, shape index: {0}]
  %s7 = inlined_call_operand.vmem [shape: bf16[2,128,8], index: 7, kind: output, shape index: {1}]
  %8 = xla_tuple %s6, %s7
  %s9 = sld [smem:[#allocation0]]
  $region65: #{outer_product_mean.3} parent=0
    _
  %s11 = ssub.s32 1, %s9
  %s12 = scalar_select 0, %s11, %s9
  loop: start=0, step=1, limit=4
  $region2: #{outer_product_mean.3} parent=0 // loop_pre_header
    _
  $region3: #{outer_product_mean.3} parent=0 // loop_header
    %s14 = sphi 0, %s18
    %p15 = scmp.ge.s32.totalorder %s14, 4
    %s21 = sphi 0, %s33
    %s22 = sphi 0, %s29
    %s23 = sphi 0, %s21
    %s24 = sphi 0, %s22
    %s25 = sphi 0, %s23
    %s26 = sphi 0, %s24
    %s38 = sphi 0, %s40
    %s41 = sphi 0, %s38
    %s42 = sphi 0, %s41
    %s58 = sphi 0, %s42
    %s66 = sphi 0, %s68
    %s69 = sphi 0, %s66
    %s70 = sphi 0, %s69
    %s86 = sphi 0, %s70
    %s90 = sphi 0, %s90
    %s92 = sphi 0, %s90
    %s93 = sphi 0, %s92
    %s107 = sphi 0, %s93
    %s111 = sphi 0, %s111
    %s113 = sphi 0, %s111
    %s114 = sphi 0, %s113
    %s128 = sphi 0, %s114
    %s132 = sphi 0, %s132
    %s134 = sphi 0, %s132
    %s135 = sphi 0, %s134
    %s149 = sphi 0, %s135
    %s153 = sphi 0, %s153
    %s155 = sphi 0, %s153
    %s156 = sphi 0, %s155
    %s170 = sphi 0, %s156
    %s178 = sphi 0, %s180
    %s181 = sphi 0, %s178
    %s182 = sphi 0, %s181
    %s198 = sphi 0, %s182
    %s206 = sphi 0, %s208
    %s209 = sphi 0, %s206
    %s210 = sphi 0, %s209
    %s226 = sphi 0, %s210
  $region4: #{outer_product_mean.3} parent=0 // loop_header_branch
    %17 = sbr.rel (%p15) target = $region8
  $region5: #{outer_product_mean.3} parent=0 // loop_body
    %s19 = ssub.s32 %s14, 1
    %s20 = ssub.s32 %s14, 2
    %s27 = sadd.s32 1, %s22
    %p28 = scmp.ge.s32.totalorder %s27, 1
    %s29 = scalar_select %p28, 0, %s27
    %s30 = sadd.s32 1, %s21
    %s31 = scalar_select %p28, %s30, %s21
    %p32 = scmp.ge.s32.totalorder %s31, 2
    %s33 = scalar_select %p32, 0, %s31
    %s34 = ssub.s32 %s21, %s33
    %s35 = ssub.s32 %s22, %s29
    %s36 = sor.u32 %s34, %s35
    %p37 = scmp.eq.s32.totalorder %s36, 0
    %s39 = sadd.s32 %s38, 1
    %s40 = scalar_select %p37, %s38, %s39
    %p43 = pneg %p37
    %p44 = scmp.eq.s32.totalorder %s14, 1
    %p45 = por %p43, %p44
    %p46 = scmp.ne.s32.totalorder %s38, %s41
    %p47 = scmp.eq.s32.totalorder %s14, 0
    %p48 = por %p46, %p47
    %p49 = scmp.ne.s32.totalorder %s38, %s41
    %p50 = scmp.eq.s32.totalorder %s19, 1
    %p51 = por %p49, %p50
    %p52 = scmp.ne.s32.totalorder %s41, %s42
    %p53 = scmp.eq.s32.totalorder %s19, 0
    %p54 = por %p52, %p53
    %p55 = scmp.ne.s32.totalorder %s41, %s42
    %p56 = scmp.eq.s32.totalorder %s20, 1
    %p57 = por %p55, %p56
    %p59 = scmp.ne.s32.totalorder %s42, %s58
    %p60 = scmp.eq.s32.totalorder %s20, 0
    %p61 = por %p59, %p60
    %s62 = ssub.s32 %s21, %s33
    %s63 = ssub.s32 %s22, %s29
    %s64 = sor.u32 %s62, %s63
    %p65 = scmp.eq.s32.totalorder %s64, 0
    %s67 = sadd.s32 %s66, 1
    %s68 = scalar_select %p65, %s66, %s67
    %p71 = pneg %p65
    %p72 = scmp.eq.s32.totalorder %s14, 1
    %p73 = por %p71, %p72
    %p74 = scmp.ne.s32.totalorder %s66, %s69
    %p75 = scmp.eq.s32.totalorder %s14, 0
    %p76 = por %p74, %p75
    %p77 = scmp.ne.s32.totalorder %s66, %s69
    %p78 = scmp.eq.s32.totalorder %s19, 1
    %p79 = por %p77, %p78
    %p80 = scmp.ne.s32.totalorder %s69, %s70
    %p81 = scmp.eq.s32.totalorder %s19, 0
    %p82 = por %p80, %p81
    %p83 = scmp.ne.s32.totalorder %s69, %s70
    %p84 = scmp.eq.s32.totalorder %s20, 1
    %p85 = por %p83, %p84
    %p87 = scmp.ne.s32.totalorder %s70, %s86
    %p88 = scmp.eq.s32.totalorder %s20, 0
    %p89 = por %p87, %p88
    %s91 = sadd.s32 %s90, 1
    %p94 = scmp.eq.s32.totalorder %s14, 1
    %p95 = scmp.ne.s32.totalorder %s90, %s92
    %p96 = scmp.eq.s32.totalorder %s14, 0
    %p97 = por %p95, %p96
    %p98 = scmp.ne.s32.totalorder %s90, %s92
    %p99 = scmp.eq.s32.totalorder %s19, 1
    %p100 = por %p98, %p99
    %p101 = scmp.ne.s32.totalorder %s92, %s93
    %p102 = scmp.eq.s32.totalorder %s19, 0
    %p103 = por %p101, %p102
    %p104 = scmp.ne.s32.totalorder %s92, %s93
    %p105 = scmp.eq.s32.totalorder %s20, 1
    %p106 = por %p104, %p105
    %p108 = scmp.ne.s32.totalorder %s93, %s107
    %p109 = scmp.eq.s32.totalorder %s20, 0
    %p110 = por %p108, %p109
    %s112 = sadd.s32 %s111, 1
    %p115 = scmp.eq.s32.totalorder %s14, 1
    %p116 = scmp.ne.s32.totalorder %s111, %s113
    %p117 = scmp.eq.s32.totalorder %s14, 0
    %p118 = por %p116, %p117
    %p119 = scmp.ne.s32.totalorder %s111, %s113
    %p120 = scmp.eq.s32.totalorder %s19, 1
    %p121 = por %p119, %p120
    %p122 = scmp.ne.s32.totalorder %s113, %s114
    %p123 = scmp.eq.s32.totalorder %s19, 0
    %p124 = por %p122, %p123
    %p125 = scmp.ne.s32.totalorder %s113, %s114
    %p126 = scmp.eq.s32.totalorder %s20, 1
    %p127 = por %p125, %p126
    %p129 = scmp.ne.s32.totalorder %s114, %s128
    %p130 = scmp.eq.s32.totalorder %s20, 0
    %p131 = por %p129, %p130
    %s133 = sadd.s32 %s132, 1
    %p136 = scmp.eq.s32.totalorder %s14, 1
    %p137 = scmp.ne.s32.totalorder %s132, %s134
    %p138 = scmp.eq.s32.totalorder %s14, 0
    %p139 = por %p137, %p138
    %p140 = scmp.ne.s32.totalorder %s132, %s134
    %p141 = scmp.eq.s32.totalorder %s19, 1
    %p142 = por %p140, %p141
    %p143 = scmp.ne.s32.totalorder %s134, %s135
    %p144 = scmp.eq.s32.totalorder %s19, 0
    %p145 = por %p143, %p144
    %p146 = scmp.ne.s32.totalorder %s134, %s135
    %p147 = scmp.eq.s32.totalorder %s20, 1
    %p148 = por %p146, %p147
    %p150 = scmp.ne.s32.totalorder %s135, %s149
    %p151 = scmp.eq.s32.totalorder %s20, 0
    %p152 = por %p150, %p151
    %s154 = sadd.s32 %s153, 1
    %p157 = scmp.eq.s32.totalorder %s14, 1
    %p158 = scmp.ne.s32.totalorder %s153, %s155
    %p159 = scmp.eq.s32.totalorder %s14, 0
    %p160 = por %p158, %p159
    %p161 = scmp.ne.s32.totalorder %s153, %s155
    %p162 = scmp.eq.s32.totalorder %s19, 1
    %p163 = por %p161, %p162
    %p164 = scmp.ne.s32.totalorder %s155, %s156
    %p165 = scmp.eq.s32.totalorder %s19, 0
    %p166 = por %p164, %p165
    %p167 = scmp.ne.s32.totalorder %s155, %s156
    %p168 = scmp.eq.s32.totalorder %s20, 1
    %p169 = por %p167, %p168
    %p171 = scmp.ne.s32.totalorder %s156, %s170
    %p172 = scmp.eq.s32.totalorder %s20, 0
    %p173 = por %p171, %p172
    %s174 = ssub.s32 %s21, %s33
    %s175 = ssub.s32 %s22, %s29
    %s176 = sor.u32 %s174, %s175
    %p177 = scmp.eq.s32.totalorder %s176, 0
    %s179 = sadd.s32 %s178, 1
    %s180 = scalar_select %p177, %s178, %s179
    %p183 = pneg %p177
    %p184 = scmp.eq.s32.totalorder %s14, 1
    %p185 = por %p183, %p184
    %p186 = scmp.ne.s32.totalorder %s178, %s181
    %p187 = scmp.eq.s32.totalorder %s14, 0
    %p188 = por %p186, %p187
    %p189 = scmp.ne.s32.totalorder %s178, %s181
    %p190 = scmp.eq.s32.totalorder %s19, 1
    %p191 = por %p189, %p190
    %p192 = scmp.ne.s32.totalorder %s181, %s182
    %p193 = scmp.eq.s32.totalorder %s19, 0
    %p194 = por %p192, %p193
    %p195 = scmp.ne.s32.totalorder %s181, %s182
    %p196 = scmp.eq.s32.totalorder %s20, 1
    %p197 = por %p195, %p196
    %p199 = scmp.ne.s32.totalorder %s182, %s198
    %p200 = scmp.eq.s32.totalorder %s20, 0
    %p201 = por %p199, %p200
    %s202 = ssub.s32 %s21, %s33
    %s203 = ssub.s32 %s22, %s29
    %s204 = sor.u32 %s202, %s203
    %p205 = scmp.eq.s32.totalorder %s204, 0
    %s207 = sadd.s32 %s206, 1
    %s208 = scalar_select %p205, %s206, %s207
    %p211 = pneg %p205
    %p212 = scmp.eq.s32.totalorder %s14, 1
    %p213 = por %p211, %p212
    %p214 = scmp.ne.s32.totalorder %s206, %s209
    %p215 = scmp.eq.s32.totalorder %s14, 0
    %p216 = por %p214, %p215
    %p217 = scmp.ne.s32.totalorder %s206, %s209
    %p218 = scmp.eq.s32.totalorder %s19, 1
    %p219 = por %p217, %p218
    %p220 = scmp.ne.s32.totalorder %s209, %s210
    %p221 = scmp.eq.s32.totalorder %s19, 0
    %p222 = por %p220, %p221
    %p223 = scmp.ne.s32.totalorder %s209, %s210
    %p224 = scmp.eq.s32.totalorder %s20, 1
    %p225 = por %p223, %p224
    %p227 = scmp.ne.s32.totalorder %s210, %s226
    %p228 = scmp.eq.s32.totalorder %s20, 0
    %p229 = por %p227, %p228
    %p230 = scmp.le.s32.totalorder 1, %s14
    %p231 = scmp.lt.s32.totalorder %s14, 3
    %p232 = pnand %p230, %p231
    %p233 = pneg %p232
    // Predicated region
    $region9: #{outer_product_mean.3} parent=5 // pred_check
      _
    $region10: #{outer_product_mean.3} parent=5 // pred_check_branch
      %235 = sbr.rel (%p232) target = $region12
    $region11: #{outer_product_mean.3} parent=5 // pred_region
      %s236 = ssub.s32 %s14, 1
      // Predicated region
      $region13: #{outer_product_mean.3} parent=11 // pred_check
        %p237 = pneg %p103
      $region14: #{outer_product_mean.3} parent=11 // pred_check_branch
        %239 = sbr.rel (%p237) target = $region16
      $region15: #{outer_product_mean.3} parent=11 // pred_region
        _
      $region16: #{outer_product_mean.3} parent=11 // pred_fallthru
        _
      // Predicated region
      $region17: #{outer_product_mean.3} parent=11 // pred_check
        %p240 = pneg %p124
      $region18: #{outer_product_mean.3} parent=11 // pred_check_branch
        %242 = sbr.rel (%p240) target = $region20
      $region19: #{outer_product_mean.3} parent=11 // pred_region
        _
      $region20: #{outer_product_mean.3} parent=11 // pred_fallthru
        _
      // Predicated region
      $region21: #{outer_product_mean.3} parent=11 // pred_check
        %p243 = pneg %p145
      $region22: #{outer_product_mean.3} parent=11 // pred_check_branch
        %245 = sbr.rel (%p243) target = $region24
      $region23: #{outer_product_mean.3} parent=11 // pred_region
        _
      $region24: #{outer_product_mean.3} parent=11 // pred_fallthru
        _
      // Predicated region
      $region25: #{outer_product_mean.3} parent=11 // pred_check
        %p246 = pneg %p166
      $region26: #{outer_product_mean.3} parent=11 // pred_check_branch
        %248 = sbr.rel (%p246) target = $region28
      $region27: #{outer_product_mean.3} parent=11 // pred_region
        _
      $region28: #{outer_product_mean.3} parent=11 // pred_fallthru
        _
    $region12: #{outer_product_mean.3} parent=5 // pred_fallthru
      _
    %p249 = scmp.lt.s32.totalorder %s14, 2
    // Predicated region
    $region29: #{outer_product_mean.3} parent=5 // pred_check
      %p250 = pneg %p249
    $region30: #{outer_product_mean.3} parent=5 // pred_check_branch
      %252 = sbr.rel (%p250) target = $region32
    $region31: #{outer_product_mean.3} parent=5 // pred_region
      // Predicated region
      $region33: #{outer_product_mean.3} parent=31 // pred_check
        %p253 = pneg %p48
      $region34: #{outer_product_mean.3} parent=31 // pred_check_branch
        %255 = sbr.rel (%p253) target = $region36
      $region35: #{outer_product_mean.3} parent=31 // pred_region
        %s256 = smul.u32 16, %s22
        %p257 = scmp.lt.s32.totalorder %s21, 1
        %s258 = scalar_select %p257, %s21, 1
        %p259 = scmp.lt.s32.totalorder %s256, 15
        %s260 = scalar_select %p259, %s256, 15
        %s261 = smul.addr %s258, 16
        %s262 = sadd.s32 %s260, %s261
        %s263 = smul.addr %s262, 8
        %s264 = scalar_lea.vmem %s0, %s263
        %s265 = smul.u32 16, %s22
      $region36: #{outer_product_mean.3} parent=31 // pred_fallthru
        _
      // Predicated region
      $region37: #{outer_product_mean.3} parent=31 // pred_check
        %p266 = pneg %p76
      $region38: #{outer_product_mean.3} parent=31 // pred_check_branch
        %268 = sbr.rel (%p266) target = $region40
      $region39: #{outer_product_mean.3} parent=31 // pred_region
        %s269 = smul.u32 16, %s22
        %p270 = scmp.lt.s32.totalorder %s21, 1
        %s271 = scalar_select %p270, %s21, 1
        %p272 = scmp.lt.s32.totalorder %s269, 15
        %s273 = scalar_select %p272, %s269, 15
        %s274 = smul.addr %s271, 16
        %s275 = sadd.s32 %s273, %s274
        %s276 = smul.addr %s275, 8
        %s277 = scalar_lea.vmem %s1, %s276
        %s278 = smul.u32 16, %s22
      $region40: #{outer_product_mean.3} parent=31 // pred_fallthru
        _
    $region32: #{outer_product_mean.3} parent=5 // pred_fallthru
      _
    %p279 = scmp.le.s32.totalorder 1, %s14
    %p280 = scmp.lt.s32.totalorder %s14, 3
    %p281 = pnand %p279, %p280
    %p282 = pneg %p281
    // Predicated region
    $region41: #{outer_product_mean.3} parent=5 // pred_check
      _
    $region42: #{outer_product_mean.3} parent=5 // pred_check_branch
      %284 = sbr.rel (%p281) target = $region44
    $region43: #{outer_product_mean.3} parent=5 // pred_region
      %s285 = ssub.s32 %s14, 1
      %s286 = smul.u32 16, %s24
      %p287 = scmp.lt.s32.totalorder %s23, 1
      %s288 = scalar_select %p287, %s23, 1
      %p289 = scmp.lt.s32.totalorder %s286, 15
      %s290 = scalar_select %p289, %s286, 15
      %s291 = smul.addr %s288, 16
      %s292 = sadd.s32 %s290, %s291
      %s293 = smul.addr %s292, 8
      %s294 = scalar_lea.vmem %s0, %s293
      %p295 = pneg %p54
      %p296 = pneg %p51
      %s297 = smul.u32 16, %s24
      %p298 = scmp.lt.s32.totalorder %s23, 1
      %s299 = scalar_select %p298, %s23, 1
      %p300 = scmp.lt.s32.totalorder %s297, 15
      %s301 = scalar_select %p300, %s297, 15
      %s302 = smul.addr %s299, 16
      %s303 = sadd.s32 %s301, %s302
      %s304 = smul.addr %s303, 8
      %s305 = scalar_lea.vmem %s1, %s304
      %p306 = pneg %p82
      %p307 = pneg %p79
      %p308 = pneg %p103
      %p309 = pneg %p100
      %p310 = pneg %p124
      %p311 = pneg %p121
      %p312 = pneg %p145
      %p313 = pneg %p142
      %p314 = pneg %p166
      %p315 = pneg %p163
      %p316 = pneg %p194
      %p317 = pneg %p191
      %s318 = smul.u32 16, %s24
      %p319 = scmp.lt.s32.totalorder %s23, 1
      %s320 = scalar_select %p319, %s23, 1
      %p321 = scmp.lt.s32.totalorder %s318, 15
      %s322 = scalar_select %p321, %s318, 15
      %s323 = smul.addr %s320, 16
      %s324 = sadd.s32 %s322, %s323
      %s325 = smul.addr %s324, 4
      %s326 = scalar_lea.vmem %s6, %s325
      %p327 = pneg %p222
      %p328 = pneg %p219
      %s329 = smul.u32 16, %s24
      %p330 = scmp.lt.s32.totalorder %s23, 1
      %s331 = scalar_select %p330, %s23, 1
      %p332 = scmp.lt.s32.totalorder %s329, 15
      %s333 = scalar_select %p332, %s329, 15
      %s334 = smul.addr %s331, 16
      %s335 = sadd.s32 %s333, %s334
      %s336 = smul.addr %s335, 4
      %s337 = scalar_lea.vmem %s7, %s336
      %s338 = smul.u32 16, %s24
      %p339 = scmp.lt.s32.totalorder %s23, 1
      %s340 = scalar_select %p339, %s23, 1
      %p341 = scmp.lt.s32.totalorder %s338, 15
      %s342 = scalar_select %p341, %s338, 15
      %s343 = smul.addr %s340, 16
      %s344 = sadd.s32 %s342, %s343
      %s345 = smul.addr %s344, 8
      %s346 = scalar_lea.vmem %s0, %s345
      %s347 = smul.u32 16, %s24
      %s348 = smul.u32 16, %s24
      %p349 = scmp.lt.s32.totalorder %s23, 1
      %s350 = scalar_select %p349, %s23, 1
      %p351 = scmp.lt.s32.totalorder %s348, 15
      %s352 = scalar_select %p351, %s348, 15
      %s353 = smul.addr %s350, 16
      %s354 = sadd.s32 %s352, %s353
      %s355 = smul.addr %s354, 8
      %s356 = scalar_lea.vmem %s1, %s355
      %s357 = smul.u32 16, %s24
      %s358 = smul.u32 16, %s24
      %p359 = scmp.lt.s32.totalorder %s23, 1
      %s360 = scalar_select %p359, %s23, 1
      %p361 = scmp.lt.s32.totalorder %s358, 15
      %s362 = scalar_select %p361, %s358, 15
      %s363 = smul.addr %s360, 16
      %s364 = sadd.s32 %s362, %s363
      %s365 = smul.addr %s364, 4
      %s366 = scalar_lea.vmem %s6, %s365
      %s367 = smul.u32 16, %s24
      %s368 = smul.u32 16, %s24
      %p369 = scmp.lt.s32.totalorder %s23, 1
      %s370 = scalar_select %p369, %s23, 1
      %p371 = scmp.lt.s32.totalorder %s368, 15
      %s372 = scalar_select %p371, %s368, 15
      %s373 = smul.addr %s370, 16
      %s374 = sadd.s32 %s372, %s373
      %s375 = smul.addr %s374, 4
      %s376 = scalar_lea.vmem %s7, %s375
      %s377 = smul.u32 16, %s24
      %v379 = vld [vmem:[%s346] sm:$0xff]
      %v380 = vld [vmem:[%s346 + $0x8] sm:$0xff]
      %v381 = vld [vmem:[%s346 + $0x10] sm:$0xff]
      %v382 = vld [vmem:[%s346 + $0x18] sm:$0xff]
      %v383 = vld [vmem:[%s346 + $0x20] sm:$0xff]
      %v384 = vld [vmem:[%s346 + $0x28] sm:$0xff]
      %v385 = vld [vmem:[%s346 + $0x30] sm:$0xff]
      %v386 = vld [vmem:[%s346 + $0x38] sm:$0xff]
      %v387 = vld [vmem:[%s346 + $0x40] sm:$0xff]
      %v388 = vld [vmem:[%s346 + $0x48] sm:$0xff]
      %v389 = vld [vmem:[%s346 + $0x50] sm:$0xff]
      %v390 = vld [vmem:[%s346 + $0x58] sm:$0xff]
      %v391 = vld [vmem:[%s346 + $0x60] sm:$0xff]
      %v392 = vld [vmem:[%s346 + $0x68] sm:$0xff]
      %v393 = vld [vmem:[%s346 + $0x70] sm:$0xff]
      %v394 = vld [vmem:[%s346 + $0x78] sm:$0xff]
      %v395 = vld [vmem:[%s356] sm:$0xff]
      %v396 = vld [vmem:[%s356 + $0x8] sm:$0xff]
      %v397 = vld [vmem:[%s356 + $0x10] sm:$0xff]
      %v398 = vld [vmem:[%s356 + $0x18] sm:$0xff]
      %v399 = vld [vmem:[%s356 + $0x20] sm:$0xff]
      %v400 = vld [vmem:[%s356 + $0x28] sm:$0xff]
      %v401 = vld [vmem:[%s356 + $0x30] sm:$0xff]
      %v402 = vld [vmem:[%s356 + $0x38] sm:$0xff]
      %v403 = vld [vmem:[%s356 + $0x40] sm:$0xff]
      %v404 = vld [vmem:[%s356 + $0x48] sm:$0xff]
      %v405 = vld [vmem:[%s356 + $0x50] sm:$0xff]
      %v406 = vld [vmem:[%s356 + $0x58] sm:$0xff]
      %v407 = vld [vmem:[%s356 + $0x60] sm:$0xff]
      %v408 = vld [vmem:[%s356 + $0x68] sm:$0xff]
      %v409 = vld [vmem:[%s356 + $0x70] sm:$0xff]
      %v410 = vld [vmem:[%s356 + $0x78] sm:$0xff]
      %vm411 = vcmask 261120
      %v412 = vsel %vm411, %v379, 0.0
      %413 = vadd.xlane.f32.xlu0 %v412
      %v414 = vpop.xlane.xlu0 %413
      %v415 = vsel %vm411, %v380, 0.0
      %416 = vadd.xlane.f32.xlu0 %v415
      %v417 = vpop.xlane.xlu0 %416
      %v418 = vsel %vm411, %v381, 0.0
      %419 = vadd.xlane.f32.xlu0 %v418
      %v420 = vpop.xlane.xlu0 %419
      %v421 = vsel %vm411, %v382, 0.0
      %422 = vadd.xlane.f32.xlu0 %v421
      %v423 = vpop.xlane.xlu0 %422
      %v424 = vsel %vm411, %v383, 0.0
      %425 = vadd.xlane.f32.xlu0 %v424
      %v426 = vpop.xlane.xlu0 %425
      %v427 = vsel %vm411, %v384, 0.0
      %428 = vadd.xlane.f32.xlu0 %v427
      %v429 = vpop.xlane.xlu0 %428
      %v430 = vsel %vm411, %v385, 0.0
      %431 = vadd.xlane.f32.xlu0 %v430
      %v432 = vpop.xlane.xlu0 %431
      %v433 = vsel %vm411, %v386, 0.0
      %434 = vadd.xlane.f32.xlu0 %v433
      %v435 = vpop.xlane.xlu0 %434
      %v436 = vsel %vm411, %v387, 0.0
      %437 = vadd.xlane.f32.xlu0 %v436
      %v438 = vpop.xlane.xlu0 %437
      %v439 = vsel %vm411, %v388, 0.0
      %440 = vadd.xlane.f32.xlu0 %v439
      %v441 = vpop.xlane.xlu0 %440
      %v442 = vsel %vm411, %v389, 0.0
      %443 = vadd.xlane.f32.xlu0 %v442
      %v444 = vpop.xlane.xlu0 %443
      %v445 = vsel %vm411, %v390, 0.0
      %446 = vadd.xlane.f32.xlu0 %v445
      %v447 = vpop.xlane.xlu0 %446
      %v448 = vsel %vm411, %v391, 0.0
      %449 = vadd.xlane.f32.xlu0 %v448
      %v450 = vpop.xlane.xlu0 %449
      %v451 = vsel %vm411, %v392, 0.0
      %452 = vadd.xlane.f32.xlu0 %v451
      %v453 = vpop.xlane.xlu0 %452
      %v454 = vsel %vm411, %v393, 0.0
      %455 = vadd.xlane.f32.xlu0 %v454
      %v456 = vpop.xlane.xlu0 %455
      %v457 = vsel %vm411, %v394, 0.0
      %458 = vadd.xlane.f32.xlu0 %v457
      %v459 = vpop.xlane.xlu0 %458
      %v460 = vrcp.pop 32.0
      %v461 = vmul.f32 %v414, %v460
      %v462 = vmul.f32 %v417, %v460
      %v463 = vmul.f32 %v420, %v460
      %v464 = vmul.f32 %v423, %v460
      %v465 = vmul.f32 %v426, %v460
      %v466 = vmul.f32 %v429, %v460
      %v467 = vmul.f32 %v432, %v460
      %v468 = vmul.f32 %v435, %v460
      %v469 = vmul.f32 %v438, %v460
      %v470 = vmul.f32 %v441, %v460
      %v471 = vmul.f32 %v444, %v460
      %v472 = vmul.f32 %v447, %v460
      %v473 = vmul.f32 %v450, %v460
      %v474 = vmul.f32 %v453, %v460
      %v475 = vmul.f32 %v456, %v460
      %v476 = vmul.f32 %v459, %v460
      %v477 = vsub.f32 %v379, %v461
      %v478 = vsub.f32 %v380, %v462
      %v479 = vsub.f32 %v381, %v463
      %v480 = vsub.f32 %v382, %v464
      %v481 = vsub.f32 %v383, %v465
      %v482 = vsub.f32 %v384, %v466
      %v483 = vsub.f32 %v385, %v467
      %v484 = vsub.f32 %v386, %v468
      %v485 = vsub.f32 %v387, %v469
      %v486 = vsub.f32 %v388, %v470
      %v487 = vsub.f32 %v389, %v471
      %v488 = vsub.f32 %v390, %v472
      %v489 = vsub.f32 %v391, %v473
      %v490 = vsub.f32 %v392, %v474
      %v491 = vsub.f32 %v393, %v475
      %v492 = vsub.f32 %v394, %v476
      %v493 = vmul.f32 %v477, %v477
      %v494 = vmul.f32 %v478, %v478
      %v495 = vmul.f32 %v479, %v479
      %v496 = vmul.f32 %v480, %v480
      %v497 = vmul.f32 %v481, %v481
      %v498 = vmul.f32 %v482, %v482
      %v499 = vmul.f32 %v483, %v483
      %v500 = vmul.f32 %v484, %v484
      %v501 = vmul.f32 %v485, %v485
      %v502 = vmul.f32 %v486, %v486
      %v503 = vmul.f32 %v487, %v487
      %v504 = vmul.f32 %v488, %v488
      %v505 = vmul.f32 %v489, %v489
      %v506 = vmul.f32 %v490, %v490
      %v507 = vmul.f32 %v491, %v491
      %v508 = vmul.f32 %v492, %v492
      %v509 = vsel %vm411, %v493, 0.0
      %510 = vadd.xlane.f32.xlu0 %v509
      %v511 = vpop.xlane.xlu0 %510
      %v512 = vsel %vm411, %v494, 0.0
      %513 = vadd.xlane.f32.xlu0 %v512
      %v514 = vpop.xlane.xlu0 %513
      %v515 = vsel %vm411, %v495, 0.0
      %516 = vadd.xlane.f32.xlu0 %v515
      %v517 = vpop.xlane.xlu0 %516
      %v518 = vsel %vm411, %v496, 0.0
      %519 = vadd.xlane.f32.xlu0 %v518
      %v520 = vpop.xlane.xlu0 %519
      %v521 = vsel %vm411, %v497, 0.0
      %522 = vadd.xlane.f32.xlu0 %v521
      %v523 = vpop.xlane.xlu0 %522
      %v524 = vsel %vm411, %v498, 0.0
      %525 = vadd.xlane.f32.xlu0 %v524
      %v526 = vpop.xlane.xlu0 %525
      %v527 = vsel %vm411, %v499, 0.0
      %528 = vadd.xlane.f32.xlu0 %v527
      %v529 = vpop.xlane.xlu0 %528
      %v530 = vsel %vm411, %v500, 0.0
      %531 = vadd.xlane.f32.xlu0 %v530
      %v532 = vpop.xlane.xlu0 %531
      %v533 = vsel %vm411, %v501, 0.0
      %534 = vadd.xlane.f32.xlu0 %v533
      %v535 = vpop.xlane.xlu0 %534
      %v536 = vsel %vm411, %v502, 0.0
      %537 = vadd.xlane.f32.xlu0 %v536
      %v538 = vpop.xlane.xlu0 %537
      %v539 = vsel %vm411, %v503, 0.0
      %540 = vadd.xlane.f32.xlu0 %v539
      %v541 = vpop.xlane.xlu0 %540
      %v542 = vsel %vm411, %v504, 0.0
      %543 = vadd.xlane.f32.xlu0 %v542
      %v544 = vpop.xlane.xlu0 %543
      %v545 = vsel %vm411, %v505, 0.0
      %546 = vadd.xlane.f32.xlu0 %v545
      %v547 = vpop.xlane.xlu0 %546
      %v548 = vsel %vm411, %v506, 0.0
      %549 = vadd.xlane.f32.xlu0 %v548
      %v550 = vpop.xlane.xlu0 %549
      %v551 = vsel %vm411, %v507, 0.0
      %552 = vadd.xlane.f32.xlu0 %v551
      %v553 = vpop.xlane.xlu0 %552
      %v554 = vsel %vm411, %v508, 0.0
      %555 = vadd.xlane.f32.xlu0 %v554
      %v556 = vpop.xlane.xlu0 %555
      %v557 = vmul.f32 %v511, %v460
      %v558 = vmul.f32 %v514, %v460
      %v559 = vmul.f32 %v517, %v460
      %v560 = vmul.f32 %v520, %v460
      %v561 = vmul.f32 %v523, %v460
      %v562 = vmul.f32 %v526, %v460
      %v563 = vmul.f32 %v529, %v460
      %v564 = vmul.f32 %v532, %v460
      %v565 = vmul.f32 %v535, %v460
      %v566 = vmul.f32 %v538, %v460
      %v567 = vmul.f32 %v541, %v460
      %v568 = vmul.f32 %v544, %v460
      %v569 = vmul.f32 %v547, %v460
      %v570 = vmul.f32 %v550, %v460
      %v571 = vmul.f32 %v553, %v460
      %v572 = vmul.f32 %v556, %v460
      %v573 = vadd.f32 %v557, 1e-05
      %v574 = vadd.f32 %v558, 1e-05
      %v575 = vadd.f32 %v559, 1e-05
      %v576 = vadd.f32 %v560, 1e-05
      %v577 = vadd.f32 %v561, 1e-05
      %v578 = vadd.f32 %v562, 1e-05
      %v579 = vadd.f32 %v563, 1e-05
      %v580 = vadd.f32 %v564, 1e-05
      %v581 = vadd.f32 %v565, 1e-05
      %v582 = vadd.f32 %v566, 1e-05
      %v583 = vadd.f32 %v567, 1e-05
      %v584 = vadd.f32 %v568, 1e-05
      %v585 = vadd.f32 %v569, 1e-05
      %v586 = vadd.f32 %v570, 1e-05
      %v587 = vadd.f32 %v571, 1e-05
      %v588 = vadd.f32 %v572, 1e-05
      %v589 = vrsqrt.pop %v573
      %v590 = vrsqrt.pop %v574
      %v591 = vrsqrt.pop %v575
      %v592 = vrsqrt.pop %v576
      %v593 = vrsqrt.pop %v577
      %v594 = vrsqrt.pop %v578
      %v595 = vrsqrt.pop %v579
      %v596 = vrsqrt.pop %v580
      %v597 = vrsqrt.pop %v581
      %v598 = vrsqrt.pop %v582
      %v599 = vrsqrt.pop %v583
      %v600 = vrsqrt.pop %v584
      %v601 = vrsqrt.pop %v585
      %v602 = vrsqrt.pop %v586
      %v603 = vrsqrt.pop %v587
      %v604 = vrsqrt.pop %v588
      %v605 = vmul.f32 %v477, %v589
      %v606 = vmul.f32 %v478, %v590
      %v607 = vmul.f32 %v479, %v591
      %v608 = vmul.f32 %v480, %v592
      %v609 = vmul.f32 %v481, %v593
      %v610 = vmul.f32 %v482, %v594
      %v611 = vmul.f32 %v483, %v595
      %v612 = vmul.f32 %v484, %v596
      %v613 = vmul.f32 %v485, %v597
      %v614 = vmul.f32 %v486, %v598
      %v615 = vmul.f32 %v487, %v599
      %v616 = vmul.f32 %v488, %v600
      %v617 = vmul.f32 %v489, %v601
      %v618 = vmul.f32 %v490, %v602
      %v619 = vmul.f32 %v491, %v603
      %v620 = vmul.f32 %v492, %v604
      %v621 = vld [vmem:[%s2] sm:$0x1]
      %v623 = vlaneseq
      %v624 = vshrl.u32 %v623, 7
      %v625 = vsub.s32 0, %v624
      %v626 = vrot.slane %v621, %v625
      %v628 = vmul.f32 %v605, %v626
      %v629 = vmul.f32 %v606, %v626
      %v630 = vmul.f32 %v607, %v626
      %v631 = vmul.f32 %v608, %v626
      %v632 = vmul.f32 %v609, %v626
      %v633 = vmul.f32 %v610, %v626
      %v634 = vmul.f32 %v611, %v626
      %v635 = vmul.f32 %v612, %v626
      %v636 = vmul.f32 %v613, %v626
      %v637 = vmul.f32 %v614, %v626
      %v638 = vmul.f32 %v615, %v626
      %v639 = vmul.f32 %v616, %v626
      %v640 = vmul.f32 %v617, %v626
      %v641 = vmul.f32 %v618, %v626
      %v642 = vmul.f32 %v619, %v626
      %v643 = vmul.f32 %v620, %v626
      %v644 = vld [vmem:[%s3] sm:$0x1]
      %v646 = vlaneseq
      %v647 = vshrl.u32 %v646, 7
      %v648 = vsub.s32 0, %v647
      %v649 = vrot.slane %v644, %v648
      %v651 = vadd.f32 %v628, %v649
      %v652 = vadd.f32 %v629, %v649
      %v653 = vadd.f32 %v630, %v649
      %v654 = vadd.f32 %v631, %v649
      %v655 = vadd.f32 %v632, %v649
      %v656 = vadd.f32 %v633, %v649
      %v657 = vadd.f32 %v634, %v649
      %v658 = vadd.f32 %v635, %v649
      %v659 = vadd.f32 %v636, %v649
      %v660 = vadd.f32 %v637, %v649
      %v661 = vadd.f32 %v638, %v649
      %v662 = vadd.f32 %v639, %v649
      %v663 = vadd.f32 %v640, %v649
      %v664 = vadd.f32 %v641, %v649
      %v665 = vadd.f32 %v642, %v649
      %v666 = vadd.f32 %v643, %v649
      %v667 = vpack.c.bf16 %v652, %v651
      %v668 = vpack.c.bf16 %v654, %v653
      %v669 = vpack.c.bf16 %v656, %v655
      %v670 = vpack.c.bf16 %v658, %v657
      %v671 = vpack.c.bf16 %v660, %v659
      %v672 = vpack.c.bf16 %v662, %v661
      %v673 = vpack.c.bf16 %v664, %v663
      %v674 = vpack.c.bf16 %v666, %v665
      %v675 = vld [vmem:[%s4] sm:$0xf]
      %v676 = vld [vmem:[%s4 + $0x4] sm:$0xf]
      %v677 = vld [vmem:[%s4 + $0x8] sm:$0xf]
      %v678 = vld [vmem:[%s4 + $0xc] sm:$0xf]
      %v679 = vld [vmem:[%s5] sm:$0x1]
      %v681 = vlaneseq
      %v682 = vshrl.u32 %v681, 7
      %v683 = vsub.s32 0, %v682
      %v684 = vrot.slane %v679, %v683
      %v690 = vunpack.c.l.b16 %v675
      %v691 = vunpack.c.l.b16 %v676
      %v692 = vunpack.c.l.b16 %v677
      %v693 = vunpack.c.l.b16 %v678
      %v694 = vpack.c.b16 %v691, %v690
      %v695 = vpack.c.b16 %v693, %v692
      %v699 = vsel %vm411, %v667, 0
      %v702 = vsel %vm411, %v668, 0
      %v705 = vsel %vm411, %v669, 0
      %v708 = vsel %vm411, %v670, 0
      %v711 = vsel %vm411, %v671, 0
      %v714 = vsel %vm411, %v672, 0
      %v717 = vsel %vm411, %v673, 0
      %v720 = vsel %vm411, %v674, 0
      %722 = vmatprep.subr.bf16.mxu0 0
      %723 = vmatpush1.bf16.msra.mxu0 %v694
      %724 = vmatprep.subr.bf16.mxu0 0
      %725 = vmatpush1.bf16.msra.mxu0 %v695
      %726 = vmatprep.subr.bf16.mxu0 0
      %727 = vmatpush1.bf16.msra.mxu0 0
      %728 = vmatprep.subr.bf16.mxu0 0
      %729 = vmatpush1.bf16.msra.mxu0 0
      %730 = vmatprep.subr.bf16.mxu0 0
      %731 = vmatpush1.bf16.msra.mxu0 0
      %732 = vmatprep.subr.bf16.mxu0 0
      %733 = vmatpush1.bf16.msra.mxu0 0
      %734 = vmatprep.subr.bf16.mxu0 0
      %735 = vmatpush1.bf16.msra.mxu0 0
      %736 = vmatprep.subr.bf16.mxu0 0
      %737 = vmatpush1.bf16.msra.mxu0 0
      %738 = vmatprep.subr.bf16.mxu0 0
      %739 = vmatpush1.bf16.msra.mxu0 0
      %740 = vmatprep.subr.bf16.mxu0 0
      %741 = vmatpush1.bf16.msra.mxu0 0
      %742 = vmatprep.subr.bf16.mxu0 0
      %743 = vmatpush1.bf16.msra.mxu0 0
      %744 = vmatprep.subr.bf16.mxu0 0
      %745 = vmatpush1.bf16.msra.mxu0 0
      %746 = vmatprep.subr.bf16.mxu0 0
      %747 = vmatpush1.bf16.msra.mxu0 0
      %748 = vmatprep.subr.bf16.mxu0 0
      %749 = vmatpush1.bf16.msra.mxu0 0
      %750 = vmatprep.subr.bf16.mxu0 0
      %751 = vmatpush1.bf16.msra.mxu0 0
      %752 = vmatprep.subr.bf16.mxu0 0
      %753 = vmatpush1.bf16.msra.mxu0 0
      %754 = vmatprep.mubr.bf16.mxu0 0
      %755 = vmatmul.mubr.bf16.gmra.mrb[0].mxu0 %v699
      %v756 = vpop.f32.mrb[0].mxu0
      %v757 = vadd.f32 %v684, %v756
      %v758 = vpop.f32.mrb[0].mxu0
      %v759 = vpop.f32.mrb[0].mxu0
      %v760 = vadd.f32 %v684, %v759
      %v761 = vpop.f32.mrb[0].mxu0
      %762 = vmatprep.mubr.bf16.mxu0 0
      %763 = vmatmul.mubr.bf16.gmra.mrb[0].mxu0 %v702
      %v764 = vpop.f32.mrb[0].mxu0
      %v765 = vadd.f32 %v684, %v764
      %v766 = vpop.f32.mrb[0].mxu0
      %v767 = vpop.f32.mrb[0].mxu0
      %v768 = vadd.f32 %v684, %v767
      %v769 = vpop.f32.mrb[0].mxu0
      %770 = vmatprep.mubr.bf16.mxu0 0
      %771 = vmatmul.mubr.bf16.gmra.mrb[0].mxu0 %v705
      %v772 = vpop.f32.mrb[0].mxu0
      %v773 = vadd.f32 %v684, %v772
      %v774 = vpop.f32.mrb[0].mxu0
      %v775 = vpop.f32.mrb[0].mxu0
      %v776 = vadd.f32 %v684, %v775
      %v777 = vpop.f32.mrb[0].mxu0
      %778 = vmatprep.mubr.bf16.mxu0 0
      %779 = vmatmul.mubr.bf16.gmra.mrb[0].mxu0 %v708
      %v780 = vpop.f32.mrb[0].mxu0
      %v781 = vadd.f32 %v684, %v780
      %v782 = vpop.f32.mrb[0].mxu0
      %v783 = vpop.f32.mrb[0].mxu0
      %v784 = vadd.f32 %v684, %v783
      %v785 = vpop.f32.mrb[0].mxu0
      %786 = vmatprep.mubr.bf16.mxu0 0
      %787 = vmatmul.mubr.bf16.gmra.mrb[0].mxu0 %v711
      %v788 = vpop.f32.mrb[0].mxu0
      %v789 = vadd.f32 %v684, %v788
      %v790 = vpop.f32.mrb[0].mxu0
      %v791 = vpop.f32.mrb[0].mxu0
      %v792 = vadd.f32 %v684, %v791
      %v793 = vpop.f32.mrb[0].mxu0
      %794 = vmatprep.mubr.bf16.mxu0 0
      %795 = vmatmul.mubr.bf16.gmra.mrb[0].mxu0 %v714
      %v796 = vpop.f32.mrb[0].mxu0
      %v797 = vadd.f32 %v684, %v796
      %v798 = vpop.f32.mrb[0].mxu0
      %v799 = vpop.f32.mrb[0].mxu0
      %v800 = vadd.f32 %v684, %v799
      %v801 = vpop.f32.mrb[0].mxu0
      %802 = vmatprep.mubr.bf16.mxu0 0
      %803 = vmatmul.mubr.bf16.gmra.mrb[0].mxu0 %v717
      %v804 = vpop.f32.mrb[0].mxu0
      %v805 = vadd.f32 %v684, %v804
      %v806 = vpop.f32.mrb[0].mxu0
      %v807 = vpop.f32.mrb[0].mxu0
      %v808 = vadd.f32 %v684, %v807
      %v809 = vpop.f32.mrb[0].mxu0
      %810 = vmatprep.mubr.bf16.mxu0 0
      %811 = vmatmul.mubr.bf16.gmra.mrb[0].mxu0 %v720
      %v812 = vpop.f32.mrb[0].mxu0
      %v813 = vadd.f32 %v684, %v812
      %v814 = vpop.f32.mrb[0].mxu0
      %v815 = vpop.f32.mrb[0].mxu0
      %v816 = vadd.f32 %v684, %v815
      %v817 = vpop.f32.mrb[0].mxu0
      %818 = vdwg.mxu0
      %820 = vset.pattern.permute.xlu0 0
      %821 = vperm.xlu0 %820, %v395
      %v822 = vpop.permute.xlu0 %821
      %825 = vset.pattern.permute.xlu0 0
      %826 = vperm.xlu0 %825, %v396
      %v827 = vpop.permute.xlu0 %826
      %830 = vset.pattern.permute.xlu0 0
      %831 = vperm.xlu0 %830, %v397
      %v832 = vpop.permute.xlu0 %831
      %835 = vset.pattern.permute.xlu0 0
      %836 = vperm.xlu0 %835, %v398
      %v837 = vpop.permute.xlu0 %836
      %840 = vset.pattern.permute.xlu0 0
      %841 = vperm.xlu0 %840, %v399
      %v842 = vpop.permute.xlu0 %841
      %845 = vset.pattern.permute.xlu0 0
      %846 = vperm.xlu0 %845, %v400
      %v847 = vpop.permute.xlu0 %846
      %850 = vset.pattern.permute.xlu0 0
      %851 = vperm.xlu0 %850, %v401
      %v852 = vpop.permute.xlu0 %851
      %855 = vset.pattern.permute.xlu0 0
      %856 = vperm.xlu0 %855, %v402
      %v857 = vpop.permute.xlu0 %856
      %860 = vset.pattern.permute.xlu0 0
      %861 = vperm.xlu0 %860, %v403
      %v862 = vpop.permute.xlu0 %861
      %865 = vset.pattern.permute.xlu0 0
      %866 = vperm.xlu0 %865, %v404
      %v867 = vpop.permute.xlu0 %866
      %870 = vset.pattern.permute.xlu0 0
      %871 = vperm.xlu0 %870, %v405
      %v872 = vpop.permute.xlu0 %871
      %875 = vset.pattern.permute.xlu0 0
      %876 = vperm.xlu0 %875, %v406
      %v877 = vpop.permute.xlu0 %876
      %880 = vset.pattern.permute.xlu0 0
      %881 = vperm.xlu0 %880, %v407
      %v882 = vpop.permute.xlu0 %881
      %885 = vset.pattern.permute.xlu0 0
      %886 = vperm.xlu0 %885, %v408
      %v887 = vpop.permute.xlu0 %886
      %890 = vset.pattern.permute.xlu0 0
      %891 = vperm.xlu0 %890, %v409
      %v892 = vpop.permute.xlu0 %891
      %895 = vset.pattern.permute.xlu0 0
      %896 = vperm.xlu0 %895, %v410
      %v897 = vpop.permute.xlu0 %896
      %v899 = vmul.f32 %v757, %v822
      %v900 = vmul.f32 %v760, %v827
      %v901 = vmul.f32 %v765, %v832
      %v902 = vmul.f32 %v768, %v837
      %v903 = vmul.f32 %v773, %v842
      %v904 = vmul.f32 %v776, %v847
      %v905 = vmul.f32 %v781, %v852
      %v906 = vmul.f32 %v784, %v857
      %v907 = vmul.f32 %v789, %v862
      %v908 = vmul.f32 %v792, %v867
      %v909 = vmul.f32 %v797, %v872
      %v910 = vmul.f32 %v800, %v877
      %v911 = vmul.f32 %v805, %v882
      %v912 = vmul.f32 %v808, %v887
      %v913 = vmul.f32 %v813, %v892
      %v914 = vmul.f32 %v816, %v897
      %v915 = vpack.c.bf16 %v900, %v899
      %v916 = vpack.c.bf16 %v902, %v901
      %v917 = vpack.c.bf16 %v904, %v903
      %v918 = vpack.c.bf16 %v906, %v905
      %v919 = vpack.c.bf16 %v908, %v907
      %v920 = vpack.c.bf16 %v910, %v909
      %v921 = vpack.c.bf16 %v912, %v911
      %v922 = vpack.c.bf16 %v914, %v913
      %v931 = vunpack.c.l.b16 %v915
      %v932 = vunpack.c.h.b16 %v915
      %v933 = vunpack.c.l.b16 %v916
      %v934 = vunpack.c.h.b16 %v916
      %v935 = vunpack.c.l.b16 %v917
      %v936 = vunpack.c.h.b16 %v917
      %v937 = vunpack.c.l.b16 %v918
      %v938 = vunpack.c.h.b16 %v918
      %v939 = vunpack.c.l.b16 %v919
      %v940 = vunpack.c.h.b16 %v919
      %v941 = vunpack.c.l.b16 %v920
      %v942 = vunpack.c.h.b16 %v920
      %v943 = vunpack.c.l.b16 %v921
      %v944 = vunpack.c.h.b16 %v921
      %v945 = vunpack.c.l.b16 %v922
      %v946 = vunpack.c.h.b16 %v922
      %v947 = vpack.c.b16 %v931, %v931
      %v948 = vpack.c.b16 %v932, %v932
      %v949 = vpack.c.b16 %v933, %v933
      %v950 = vpack.c.b16 %v934, %v934
      %v951 = vpack.c.b16 %v935, %v935
      %v952 = vpack.c.b16 %v936, %v936
      %v953 = vpack.c.b16 %v937, %v937
      %v954 = vpack.c.b16 %v938, %v938
      %v955 = vpack.c.b16 %v939, %v939
      %v956 = vpack.c.b16 %v940, %v940
      %v957 = vpack.c.b16 %v941, %v941
      %v958 = vpack.c.b16 %v942, %v942
      %v959 = vpack.c.b16 %v943, %v943
      %v960 = vpack.c.b16 %v944, %v944
      %v961 = vpack.c.b16 %v945, %v945
      %v962 = vpack.c.b16 %v946, %v946
      %vm979 = vcmask 60416
      %980 = vst.msk [vmem:[%s366] sm:$0xf] %vm979, %v947
      %981 = vst.msk [vmem:[%s366 + $0x4] sm:$0xf] %vm979, %v948
      %982 = vst.msk [vmem:[%s366 + $0x8] sm:$0xf] %vm979, %v949
      %983 = vst.msk [vmem:[%s366 + $0xc] sm:$0xf] %vm979, %v950
      %984 = vst.msk [vmem:[%s366 + $0x10] sm:$0xf] %vm979, %v951
      %985 = vst.msk [vmem:[%s366 + $0x14] sm:$0xf] %vm979, %v952
      %986 = vst.msk [vmem:[%s366 + $0x18] sm:$0xf] %vm979, %v953
      %987 = vst.msk [vmem:[%s366 + $0x1c] sm:$0xf] %vm979, %v954
      %988 = vst.msk [vmem:[%s366 + $0x20] sm:$0xf] %vm979, %v955
      %989 = vst.msk [vmem:[%s366 + $0x24] sm:$0xf] %vm979, %v956
      %990 = vst.msk [vmem:[%s366 + $0x28] sm:$0xf] %vm979, %v957
      %991 = vst.msk [vmem:[%s366 + $0x2c] sm:$0xf] %vm979, %v958
      %992 = vst.msk [vmem:[%s366 + $0x30] sm:$0xf] %vm979, %v959
      %993 = vst.msk [vmem:[%s366 + $0x34] sm:$0xf] %vm979, %v960
      %994 = vst.msk [vmem:[%s366 + $0x38] sm:$0xf] %vm979, %v961
      %995 = vst.msk [vmem:[%s366 + $0x3c] sm:$0xf] %vm979, %v962
      %996 = vrot.lane.b32.xlu0 %v947, 120
      %v997 = vpop.permute.xlu0 %996
      %998 = vrot.lane.b32.xlu0 %v948, 120
      %v999 = vpop.permute.xlu0 %998
      %1000 = vrot.lane.b32.xlu0 %v949, 120
      %v1001 = vpop.permute.xlu0 %1000
      %1002 = vrot.lane.b32.xlu0 %v950, 120
      %v1003 = vpop.permute.xlu0 %1002
      %1004 = vrot.lane.b32.xlu0 %v951, 120
      %v1005 = vpop.permute.xlu0 %1004
      %1006 = vrot.lane.b32.xlu0 %v952, 120
      %v1007 = vpop.permute.xlu0 %1006
      %1008 = vrot.lane.b32.xlu0 %v953, 120
      %v1009 = vpop.permute.xlu0 %1008
      %1010 = vrot.lane.b32.xlu0 %v954, 120
      %v1011 = vpop.permute.xlu0 %1010
      %1012 = vrot.lane.b32.xlu0 %v955, 120
      %v1013 = vpop.permute.xlu0 %1012
      %1014 = vrot.lane.b32.xlu0 %v956, 120
      %v1015 = vpop.permute.xlu0 %1014
      %1016 = vrot.lane.b32.xlu0 %v957, 120
      %v1017 = vpop.permute.xlu0 %1016
      %1018 = vrot.lane.b32.xlu0 %v958, 120
      %v1019 = vpop.permute.xlu0 %1018
      %1020 = vrot.lane.b32.xlu0 %v959, 120
      %v1021 = vpop.permute.xlu0 %1020
      %1022 = vrot.lane.b32.xlu0 %v960, 120
      %v1023 = vpop.permute.xlu0 %1022
      %1024 = vrot.lane.b32.xlu0 %v961, 120
      %v1025 = vpop.permute.xlu0 %1024
      %1026 = vrot.lane.b32.xlu0 %v962, 120
      %v1027 = vpop.permute.xlu0 %1026
      %1044 = vst.msk [vmem:[%s376] sm:$0xf] %vm979, %v997
      %1045 = vst.msk [vmem:[%s376 + $0x4] sm:$0xf] %vm979, %v999
      %1046 = vst.msk [vmem:[%s376 + $0x8] sm:$0xf] %vm979, %v1001
      %1047 = vst.msk [vmem:[%s376 + $0xc] sm:$0xf] %vm979, %v1003
      %1048 = vst.msk [vmem:[%s376 + $0x10] sm:$0xf] %vm979, %v1005
      %1049 = vst.msk [vmem:[%s376 + $0x14] sm:$0xf] %vm979, %v1007
      %1050 = vst.msk [vmem:[%s376 + $0x18] sm:$0xf] %vm979, %v1009
      %1051 = vst.msk [vmem:[%s376 + $0x1c] sm:$0xf] %vm979, %v1011
      %1052 = vst.msk [vmem:[%s376 + $0x20] sm:$0xf] %vm979, %v1013
      %1053 = vst.msk [vmem:[%s376 + $0x24] sm:$0xf] %vm979, %v1015
      %1054 = vst.msk [vmem:[%s376 + $0x28] sm:$0xf] %vm979, %v1017
      %1055 = vst.msk [vmem:[%s376 + $0x2c] sm:$0xf] %vm979, %v1019
      %1056 = vst.msk [vmem:[%s376 + $0x30] sm:$0xf] %vm979, %v1021
      %1057 = vst.msk [vmem:[%s376 + $0x34] sm:$0xf] %vm979, %v1023
      %1058 = vst.msk [vmem:[%s376 + $0x38] sm:$0xf] %vm979, %v1025
      %1059 = vst.msk [vmem:[%s376 + $0x3c] sm:$0xf] %vm979, %v1027
      %s1060 = smul.u32 16, %s24
      %p1061 = scmp.lt.s32.totalorder %s23, 1
      %s1062 = scalar_select %p1061, %s23, 1
      %p1063 = scmp.lt.s32.totalorder %s1060, 15
      %s1064 = scalar_select %p1063, %s1060, 15
      %s1065 = smul.addr %s1062, 16
      %s1066 = sadd.s32 %s1064, %s1065
      %s1067 = smul.addr %s1066, 4
      %s1068 = scalar_lea.vmem %s6, %s1067
      %s1069 = smul.u32 16, %s24
      %p1070 = scmp.lt.s32.totalorder %s23, 1
      %s1071 = scalar_select %p1070, %s23, 1
      %p1072 = scmp.lt.s32.totalorder %s1069, 15
      %s1073 = scalar_select %p1072, %s1069, 15
      %s1074 = smul.addr %s1071, 16
      %s1075 = sadd.s32 %s1073, %s1074
      %s1076 = smul.addr %s1075, 4
      %s1077 = scalar_lea.vmem %s7, %s1076
      // Predicated region
      $region45: #{outer_product_mean.3} parent=43 // pred_check
        %p1078 = pneg %p191
      $region46: #{outer_product_mean.3} parent=43 // pred_check_branch
        %1080 = sbr.rel (%p1078) target = $region48
      $region47: #{outer_product_mean.3} parent=43 // pred_region
        %s1081 = smul.u32 16, %s24
      $region48: #{outer_product_mean.3} parent=43 // pred_fallthru
        _
      // Predicated region
      $region49: #{outer_product_mean.3} parent=43 // pred_check
        %p1082 = pneg %p219
      $region50: #{outer_product_mean.3} parent=43 // pred_check_branch
        %1084 = sbr.rel (%p1082) target = $region52
      $region51: #{outer_product_mean.3} parent=43 // pred_region
        %s1085 = smul.u32 16, %s24
      $region52: #{outer_product_mean.3} parent=43 // pred_fallthru
        _
    $region44: #{outer_product_mean.3} parent=5 // pred_fallthru
      _
    %p1086 = scmp.le.s32.totalorder 2, %s14
    // Predicated region
    $region53: #{outer_product_mean.3} parent=5 // pred_check
      %p1087 = pneg %p1086
    $region54: #{outer_product_mean.3} parent=5 // pred_check_branch
      %1089 = sbr.rel (%p1087) target = $region56
    $region55: #{outer_product_mean.3} parent=5 // pred_region
      %s1090 = ssub.s32 %s14, 2
      // Predicated region
      $region57: #{outer_product_mean.3} parent=55 // pred_check
        %p1091 = pneg %p197
      $region58: #{outer_product_mean.3} parent=55 // pred_check_branch
        %1093 = sbr.rel (%p1091) target = $region60
      $region59: #{outer_product_mean.3} parent=55 // pred_region
        %s1094 = smul.u32 16, %s26
        %p1095 = scmp.lt.s32.totalorder %s25, 1
        %s1096 = scalar_select %p1095, %s25, 1
        %p1097 = scmp.lt.s32.totalorder %s1094, 15
        %s1098 = scalar_select %p1097, %s1094, 15
        %s1099 = smul.addr %s1096, 16
        %s1100 = sadd.s32 %s1098, %s1099
        %s1101 = smul.addr %s1100, 4
        %s1102 = scalar_lea.vmem %s6, %s1101
      $region60: #{outer_product_mean.3} parent=55 // pred_fallthru
        _
      // Predicated region
      $region61: #{outer_product_mean.3} parent=55 // pred_check
        %p1103 = pneg %p225
      $region62: #{outer_product_mean.3} parent=55 // pred_check_branch
        %1105 = sbr.rel (%p1103) target = $region64
      $region63: #{outer_product_mean.3} parent=55 // pred_region
        %s1106 = smul.u32 16, %s26
        %p1107 = scmp.lt.s32.totalorder %s25, 1
        %s1108 = scalar_select %p1107, %s25, 1
        %p1109 = scmp.lt.s32.totalorder %s1106, 15
        %s1110 = scalar_select %p1109, %s1106, 15
        %s1111 = smul.addr %s1108, 16
        %s1112 = sadd.s32 %s1110, %s1111
        %s1113 = smul.addr %s1112, 4
        %s1114 = scalar_lea.vmem %s7, %s1113
      $region64: #{outer_product_mean.3} parent=55 // pred_fallthru
        _
    $region56: #{outer_product_mean.3} parent=5 // pred_fallthru
      _
  $region6: #{outer_product_mean.3} parent=0 // loop_footer
    %s18 = sadd.s32 1, %s14
  $region7: #{outer_product_mean.3} parent=0 // loop_footer_branch
    %13 = sbr.rel target = $region3
  $region8: #{outer_product_mean.3} parent=0 // loop_exit
    _

// kernel: outer_product_mean.5
$region0: #{outer_product_mean.5}
  #allocation0 [shape = 'u32[]', space=smem, size = 0x4, offset = 0x4, fixed_abs, tag = 'smem constant byte address 0x4 - core index']
  #allocation1 [shape = 'u32[144,128]{1,0:T(1,128)}', space=vmem, size = 0x12000, scoped, tag = 'internal scratch']
  %s0 = inlined_call_operand.vmem [shape: bf16[2,256,64], index: 0, kind: input, shape index: {}]
  %s1 = inlined_call_operand.vmem [shape: f32[2,256,1], index: 1, kind: input, shape index: {}]
  %s2 = inlined_call_operand.vmem [shape: bf16[64,16], index: 2, kind: input, shape index: {}]
  %s3 = inlined_call_operand.vmem [shape: f32[1,16], index: 3, kind: input, shape index: {}]
  %s4 = inlined_call_operand.hbm [shape: f32[2,256,16], index: 4, kind: output, shape index: {}]
  %s5 = sld [smem:[#allocation0]]
  $region49: #{outer_product_mean.5} parent=0
    _
  %s7 = ssub.s32 1, %s5
  %s8 = scalar_select 0, %s7, %s5
  $region1: #{outer_product_mean.5} parent=0
    #allocation2 [shape = 'u8[262144]{0}', space=vmem, size = 0x40000, scoped, tag = 'output window, operand 0']
    #allocation3 [shape = 's32[2]{0}', space=sflag, size = 0x8, scoped, tag = 'scoped memory for outer_product_mean.5']
    %9 = vsyncpa [#allocation3], 0
    %s10 = scalar_lea.sflag [#allocation3], 1
    %11 = vsyncpa %s10, 0
    loop: start=0, step=1, limit=4
    $region2: #{outer_product_mean.5} parent=1 // loop_pre_header
      _
    $region3: #{outer_product_mean.5} parent=1 // loop_header
      %s13 = sphi 0, %s17
      %p14 = scmp.ge.s32.totalorder %s13, 4
      %s20 = sphi 0, %s32
      %s21 = sphi 0, %s28
      %s22 = sphi 0, %s20
      %s23 = sphi 0, %s21
      %s24 = sphi 0, %s22
      %s25 = sphi 0, %s23
      %s37 = sphi 0, %s39
      %s40 = sphi 0, %s37
      %s41 = sphi 0, %s40
      %s57 = sphi 0, %s41
      %s65 = sphi 0, %s67
      %s68 = sphi 0, %s65
      %s69 = sphi 0, %s68
      %s85 = sphi 0, %s69
      %s89 = sphi 0, %s89
      %s91 = sphi 0, %s89
      %s92 = sphi 0, %s91
      %s106 = sphi 0, %s92
      %s110 = sphi 0, %s110
      %s112 = sphi 0, %s110
      %s113 = sphi 0, %s112
      %s127 = sphi 0, %s113
      %s135 = sphi 0, %s137
      %s138 = sphi 0, %s135
      %s139 = sphi 0, %s138
      %s155 = sphi 0, %s139
    $region4: #{outer_product_mean.5} parent=1 // loop_header_branch
      %16 = sbr.rel (%p14) target = $region8
    $region5: #{outer_product_mean.5} parent=1 // loop_body
      %s18 = ssub.s32 %s13, 1
      %s19 = ssub.s32 %s13, 2
      %s26 = sadd.s32 1, %s21
      %p27 = scmp.ge.s32.totalorder %s26, 1
      %s28 = scalar_select %p27, 0, %s26
      %s29 = sadd.s32 1, %s20
      %s30 = scalar_select %p27, %s29, %s20
      %p31 = scmp.ge.s32.totalorder %s30, 2
      %s32 = scalar_select %p31, 0, %s30
      %s33 = ssub.s32 %s20, %s32
      %s34 = ssub.s32 %s21, %s28
      %s35 = sor.u32 %s33, %s34
      %p36 = scmp.eq.s32.totalorder %s35, 0
      %s38 = sadd.s32 %s37, 1
      %s39 = scalar_select %p36, %s37, %s38
      %p42 = pneg %p36
      %p43 = scmp.eq.s32.totalorder %s13, 1
      %p44 = por %p42, %p43
      %p45 = scmp.ne.s32.totalorder %s37, %s40
      %p46 = scmp.eq.s32.totalorder %s13, 0
      %p47 = por %p45, %p46
      %p48 = scmp.ne.s32.totalorder %s37, %s40
      %p49 = scmp.eq.s32.totalorder %s18, 1
      %p50 = por %p48, %p49
      %p51 = scmp.ne.s32.totalorder %s40, %s41
      %p52 = scmp.eq.s32.totalorder %s18, 0
      %p53 = por %p51, %p52
      %p54 = scmp.ne.s32.totalorder %s40, %s41
      %p55 = scmp.eq.s32.totalorder %s19, 1
      %p56 = por %p54, %p55
      %p58 = scmp.ne.s32.totalorder %s41, %s57
      %p59 = scmp.eq.s32.totalorder %s19, 0
      %p60 = por %p58, %p59
      %s61 = ssub.s32 %s20, %s32
      %s62 = ssub.s32 %s21, %s28
      %s63 = sor.u32 %s61, %s62
      %p64 = scmp.eq.s32.totalorder %s63, 0
      %s66 = sadd.s32 %s65, 1
      %s67 = scalar_select %p64, %s65, %s66
      %p70 = pneg %p64
      %p71 = scmp.eq.s32.totalorder %s13, 1
      %p72 = por %p70, %p71
      %p73 = scmp.ne.s32.totalorder %s65, %s68
      %p74 = scmp.eq.s32.totalorder %s13, 0
      %p75 = por %p73, %p74
      %p76 = scmp.ne.s32.totalorder %s65, %s68
      %p77 = scmp.eq.s32.totalorder %s18, 1
      %p78 = por %p76, %p77
      %p79 = scmp.ne.s32.totalorder %s68, %s69
      %p80 = scmp.eq.s32.totalorder %s18, 0
      %p81 = por %p79, %p80
      %p82 = scmp.ne.s32.totalorder %s68, %s69
      %p83 = scmp.eq.s32.totalorder %s19, 1
      %p84 = por %p82, %p83
      %p86 = scmp.ne.s32.totalorder %s69, %s85
      %p87 = scmp.eq.s32.totalorder %s19, 0
      %p88 = por %p86, %p87
      %s90 = sadd.s32 %s89, 1
      %p93 = scmp.eq.s32.totalorder %s13, 1
      %p94 = scmp.ne.s32.totalorder %s89, %s91
      %p95 = scmp.eq.s32.totalorder %s13, 0
      %p96 = por %p94, %p95
      %p97 = scmp.ne.s32.totalorder %s89, %s91
      %p98 = scmp.eq.s32.totalorder %s18, 1
      %p99 = por %p97, %p98
      %p100 = scmp.ne.s32.totalorder %s91, %s92
      %p101 = scmp.eq.s32.totalorder %s18, 0
      %p102 = por %p100, %p101
      %p103 = scmp.ne.s32.totalorder %s91, %s92
      %p104 = scmp.eq.s32.totalorder %s19, 1
      %p105 = por %p103, %p104
      %p107 = scmp.ne.s32.totalorder %s92, %s106
      %p108 = scmp.eq.s32.totalorder %s19, 0
      %p109 = por %p107, %p108
      %s111 = sadd.s32 %s110, 1
      %p114 = scmp.eq.s32.totalorder %s13, 1
      %p115 = scmp.ne.s32.totalorder %s110, %s112
      %p116 = scmp.eq.s32.totalorder %s13, 0
      %p117 = por %p115, %p116
      %p118 = scmp.ne.s32.totalorder %s110, %s112
      %p119 = scmp.eq.s32.totalorder %s18, 1
      %p120 = por %p118, %p119
      %p121 = scmp.ne.s32.totalorder %s112, %s113
      %p122 = scmp.eq.s32.totalorder %s18, 0
      %p123 = por %p121, %p122
      %p124 = scmp.ne.s32.totalorder %s112, %s113
      %p125 = scmp.eq.s32.totalorder %s19, 1
      %p126 = por %p124, %p125
      %p128 = scmp.ne.s32.totalorder %s113, %s127
      %p129 = scmp.eq.s32.totalorder %s19, 0
      %p130 = por %p128, %p129
      %s131 = ssub.s32 %s20, %s32
      %s132 = ssub.s32 %s21, %s28
      %s133 = sor.u32 %s131, %s132
      %p134 = scmp.eq.s32.totalorder %s133, 0
      %s136 = sadd.s32 %s135, 1
      %s137 = scalar_select %p134, %s135, %s136
      %p140 = pneg %p134
      %p141 = scmp.eq.s32.totalorder %s13, 1
      %p142 = por %p140, %p141
      %p143 = scmp.ne.s32.totalorder %s135, %s138
      %p144 = scmp.eq.s32.totalorder %s13, 0
      %p145 = por %p143, %p144
      %p146 = scmp.ne.s32.totalorder %s135, %s138
      %p147 = scmp.eq.s32.totalorder %s18, 1
      %p148 = por %p146, %p147
      %p149 = scmp.ne.s32.totalorder %s138, %s139
      %p150 = scmp.eq.s32.totalorder %s18, 0
      %p151 = por %p149, %p150
      %p152 = scmp.ne.s32.totalorder %s138, %s139
      %p153 = scmp.eq.s32.totalorder %s19, 1
      %p154 = por %p152, %p153
      %p156 = scmp.ne.s32.totalorder %s139, %s155
      %p157 = scmp.eq.s32.totalorder %s19, 0
      %p158 = por %p156, %p157
      %p159 = scmp.le.s32.totalorder 1, %s13
      %p160 = scmp.lt.s32.totalorder %s13, 3
      %p161 = pnand %p159, %p160
      %p162 = pneg %p161
      // Predicated region
      $region9: #{outer_product_mean.5} parent=5 // pred_check
        _
      $region10: #{outer_product_mean.5} parent=5 // pred_check_branch
        %164 = sbr.rel (%p161) target = $region12
      $region11: #{outer_product_mean.5} parent=5 // pred_region
        %s165 = ssub.s32 %s13, 1
        // Predicated region
        $region13: #{outer_product_mean.5} parent=11 // pred_check
          %p166 = pneg %p102
        $region14: #{outer_product_mean.5} parent=11 // pred_check_branch
          %168 = sbr.rel (%p166) target = $region16
        $region15: #{outer_product_mean.5} parent=11 // pred_region
          _
        $region16: #{outer_product_mean.5} parent=11 // pred_fallthru
          _
        // Predicated region
        $region17: #{outer_product_mean.5} parent=11 // pred_check
          %p169 = pneg %p123
        $region18: #{outer_product_mean.5} parent=11 // pred_check_branch
          %171 = sbr.rel (%p169) target = $region20
        $region19: #{outer_product_mean.5} parent=11 // pred_region
          _
        $region20: #{outer_product_mean.5} parent=11 // pred_fallthru
          _
      $region12: #{outer_product_mean.5} parent=5 // pred_fallthru
        _
      %p172 = scmp.lt.s32.totalorder %s13, 2
      // Predicated region
      $region21: #{outer_product_mean.5} parent=5 // pred_check
        %p173 = pneg %p172
      $region22: #{outer_product_mean.5} parent=5 // pred_check_branch
        %175 = sbr.rel (%p173) target = $region24
      $region23: #{outer_product_mean.5} parent=5 // pred_region
        // Predicated region
        $region25: #{outer_product_mean.5} parent=23 // pred_check
          %p176 = pneg %p47
        $region26: #{outer_product_mean.5} parent=23 // pred_check_branch
          %178 = sbr.rel (%p176) target = $region28
        $region27: #{outer_product_mean.5} parent=23 // pred_region
          %s179 = smul.u32 32, %s21
          %p180 = scmp.lt.s32.totalorder %s20, 1
          %s181 = scalar_select %p180, %s20, 1
          %p182 = scmp.lt.s32.totalorder %s179, 31
          %s183 = scalar_select %p182, %s179, 31
          %s184 = smul.addr %s181, 32
          %s185 = sadd.s32 %s183, %s184
          %s186 = smul.addr %s185, 4
          %s187 = scalar_lea.vmem %s0, %s186
          %s188 = smul.u32 32, %s21
        $region28: #{outer_product_mean.5} parent=23 // pred_fallthru
          _
        // Predicated region
        $region29: #{outer_product_mean.5} parent=23 // pred_check
          %p189 = pneg %p75
        $region30: #{outer_product_mean.5} parent=23 // pred_check_branch
          %191 = sbr.rel (%p189) target = $region32
        $region31: #{outer_product_mean.5} parent=23 // pred_region
          %s192 = smul.u32 32, %s21
          %p193 = scmp.lt.s32.totalorder %s20, 1
          %s194 = scalar_select %p193, %s20, 1
          %p195 = scmp.lt.s32.totalorder %s192, 31
          %s196 = scalar_select %p195, %s192, 31
          %s197 = smul.addr %s194, 32
          %s198 = sadd.s32 %s196, %s197
          %s199 = smul.addr %s198, 8
          %s200 = scalar_lea.vmem %s1, %s199
          %s201 = smul.u32 32, %s21
        $region32: #{outer_product_mean.5} parent=23 // pred_fallthru
          _
      $region24: #{outer_product_mean.5} parent=5 // pred_fallthru
        _
      %p202 = scmp.le.s32.totalorder 1, %s13
      %p203 = scmp.lt.s32.totalorder %s13, 3
      %p204 = pnand %p202, %p203
      %p205 = pneg %p204
      // Predicated region
      $region33: #{outer_product_mean.5} parent=5 // pred_check
        _
      $region34: #{outer_product_mean.5} parent=5 // pred_check_branch
        %207 = sbr.rel (%p204) target = $region36
      $region35: #{outer_product_mean.5} parent=5 // pred_region
        %s208 = ssub.s32 %s13, 1
        %s209 = smul.u32 32, %s23
        %p210 = scmp.lt.s32.totalorder %s22, 1
        %s211 = scalar_select %p210, %s22, 1
        %p212 = scmp.lt.s32.totalorder %s209, 31
        %s213 = scalar_select %p212, %s209, 31
        %s214 = smul.addr %s211, 32
        %s215 = sadd.s32 %s213, %s214
        %s216 = smul.addr %s215, 4
        %s217 = scalar_lea.vmem %s0, %s216
        %p218 = pneg %p53
        %p219 = pneg %p50
        %s220 = smul.u32 32, %s23
        %p221 = scmp.lt.s32.totalorder %s22, 1
        %s222 = scalar_select %p221, %s22, 1
        %p223 = scmp.lt.s32.totalorder %s220, 31
        %s224 = scalar_select %p223, %s220, 31
        %s225 = smul.addr %s222, 32
        %s226 = sadd.s32 %s224, %s225
        %s227 = smul.addr %s226, 8
        %s228 = scalar_lea.vmem %s1, %s227
        %p229 = pneg %p81
        %p230 = pneg %p78
        %p231 = pneg %p102
        %p232 = pneg %p99
        %p233 = pneg %p123
        %p234 = pneg %p120
        %p235 = pneg %p151
        %p236 = pneg %p148
        %s237 = sand.u32 %s138, 1
        %s238 = scalar_lea.sflag [#allocation3], %s237
        %s239 = sand.u32 %s138, 1
        %s240 = smul.addr %s239, 256
        %s241 = scalar_lea.vmem [#allocation2], %s240
        %s242 = smul.u32 32, %s23
        %p243 = scmp.lt.s32.totalorder %s22, 1
        %s244 = scalar_select %p243, %s22, 1
        %p245 = scmp.lt.s32.totalorder %s242, 31
        %s246 = scalar_select %p245, %s242, 31
        %s247 = smul.addr %s244, 32
        %s248 = sadd.s32 %s246, %s247
        %s249 = smul.addr %s248, 4
        %s250 = scalar_lea.vmem %s0, %s249
        %s251 = smul.u32 32, %s23
        %s252 = smul.u32 32, %s23
        %p253 = scmp.lt.s32.totalorder %s22, 1
        %s254 = scalar_select %p253, %s22, 1
        %p255 = scmp.lt.s32.totalorder %s252, 31
        %s256 = scalar_select %p255, %s252, 31
        %s257 = smul.addr %s254, 32
        %s258 = sadd.s32 %s256, %s257
        %s259 = smul.addr %s258, 8
        %s260 = scalar_lea.vmem %s1, %s259
        %s261 = smul.u32 32, %s23
        %s262 = smul.u32 32, %s23
        %v264 = vld [vmem:[%s250] sm:$0xf]
        %v265 = vld [vmem:[%s250 + $0x4] sm:$0xf]
        %v266 = vld [vmem:[%s250 + $0x8] sm:$0xf]
        %v267 = vld [vmem:[%s250 + $0xc] sm:$0xf]
        %v268 = vld [vmem:[%s250 + $0x10] sm:$0xf]
        %v269 = vld [vmem:[%s250 + $0x14] sm:$0xf]
        %v270 = vld [vmem:[%s250 + $0x18] sm:$0xf]
        %v271 = vld [vmem:[%s250 + $0x1c] sm:$0xf]
        %v272 = vld [vmem:[%s250 + $0x20] sm:$0xf]
        %v273 = vld [vmem:[%s250 + $0x24] sm:$0xf]
        %v274 = vld [vmem:[%s250 + $0x28] sm:$0xf]
        %v275 = vld [vmem:[%s250 + $0x2c] sm:$0xf]
        %v276 = vld [vmem:[%s250 + $0x30] sm:$0xf]
        %v277 = vld [vmem:[%s250 + $0x34] sm:$0xf]
        %v278 = vld [vmem:[%s250 + $0x38] sm:$0xf]
        %v279 = vld [vmem:[%s250 + $0x3c] sm:$0xf]
        %v280 = vld [vmem:[%s250 + $0x40] sm:$0xf]
        %v281 = vld [vmem:[%s250 + $0x44] sm:$0xf]
        %v282 = vld [vmem:[%s250 + $0x48] sm:$0xf]
        %v283 = vld [vmem:[%s250 + $0x4c] sm:$0xf]
        %v284 = vld [vmem:[%s250 + $0x50] sm:$0xf]
        %v285 = vld [vmem:[%s250 + $0x54] sm:$0xf]
        %v286 = vld [vmem:[%s250 + $0x58] sm:$0xf]
        %v287 = vld [vmem:[%s250 + $0x5c] sm:$0xf]
        %v288 = vld [vmem:[%s250 + $0x60] sm:$0xf]
        %v289 = vld [vmem:[%s250 + $0x64] sm:$0xf]
        %v290 = vld [vmem:[%s250 + $0x68] sm:$0xf]
        %v291 = vld [vmem:[%s250 + $0x6c] sm:$0xf]
        %v292 = vld [vmem:[%s250 + $0x70] sm:$0xf]
        %v293 = vld [vmem:[%s250 + $0x74] sm:$0xf]
        %v294 = vld [vmem:[%s250 + $0x78] sm:$0xf]
        %v295 = vld [vmem:[%s250 + $0x7c] sm:$0xf]
        %v296 = vld [vmem:[%s2] sm:$0xf]
        %v297 = vld [vmem:[%s2 + $0x4] sm:$0xf]
        %v298 = vld [vmem:[%s2 + $0x8] sm:$0xf]
        %v299 = vld [vmem:[%s2 + $0xc] sm:$0xf]
        %v300 = vld [vmem:[%s2 + $0x10] sm:$0xf]
        %v301 = vld [vmem:[%s2 + $0x14] sm:$0xf]
        %v302 = vld [vmem:[%s2 + $0x18] sm:$0xf]
        %v303 = vld [vmem:[%s2 + $0x1c] sm:$0xf]
        %v304 = vld [vmem:[%s3] sm:$0x1]
        %v306 = vlaneseq
        %v307 = vshrl.u32 %v306, 7
        %v308 = vsub.s32 0, %v307
        %v309 = vrot.slane %v304, %v308
        %v343 = vunpack.c.l.b16 %v264
        %v344 = vunpack.c.l.b16 %v265
        %v345 = vunpack.c.l.b16 %v266
        %v346 = vunpack.c.l.b16 %v267
        %v347 = vunpack.c.l.b16 %v268
        %v348 = vunpack.c.l.b16 %v269
        %v349 = vunpack.c.l.b16 %v270
        %v350 = vunpack.c.l.b16 %v271
        %v351 = vunpack.c.l.b16 %v272
        %v352 = vunpack.c.l.b16 %v273
        %v353 = vunpack.c.l.b16 %v274
        %v354 = vunpack.c.l.b16 %v275
        %v355 = vunpack.c.l.b16 %v276
        %v356 = vunpack.c.l.b16 %v277
        %v357 = vunpack.c.l.b16 %v278
        %v358 = vunpack.c.l.b16 %v279
        %v359 = vunpack.c.l.b16 %v280
        %v360 = vunpack.c.l.b16 %v281
        %v361 = vunpack.c.l.b16 %v282
        %v362 = vunpack.c.l.b16 %v283
        %v363 = vunpack.c.l.b16 %v284
        %v364 = vunpack.c.l.b16 %v285
        %v365 = vunpack.c.l.b16 %v286
        %v366 = vunpack.c.l.b16 %v287
        %v367 = vunpack.c.l.b16 %v288
        %v368 = vunpack.c.l.b16 %v289
        %v369 = vunpack.c.l.b16 %v290
        %v370 = vunpack.c.l.b16 %v291
        %v371 = vunpack.c.l.b16 %v292
        %v372 = vunpack.c.l.b16 %v293
        %v373 = vunpack.c.l.b16 %v294
        %v374 = vunpack.c.l.b16 %v295
        %v375 = vpack.c.b16 %v344, %v343
        %v376 = vpack.c.b16 %v346, %v345
        %v377 = vpack.c.b16 %v348, %v347
        %v378 = vpack.c.b16 %v350, %v349
        %v379 = vpack.c.b16 %v352, %v351
        %v380 = vpack.c.b16 %v354, %v353
        %v381 = vpack.c.b16 %v356, %v355
        %v382 = vpack.c.b16 %v358, %v357
        %v383 = vpack.c.b16 %v360, %v359
        %v384 = vpack.c.b16 %v362, %v361
        %v385 = vpack.c.b16 %v364, %v363
        %v386 = vpack.c.b16 %v366, %v365
        %v387 = vpack.c.b16 %v368, %v367
        %v388 = vpack.c.b16 %v370, %v369
        %v389 = vpack.c.b16 %v372, %v371
        %v390 = vpack.c.b16 %v374, %v373
        %v399 = vunpack.c.l.b16 %v296
        %v400 = vunpack.c.l.b16 %v297
        %v401 = vunpack.c.l.b16 %v298
        %v402 = vunpack.c.l.b16 %v299
        %v403 = vunpack.c.l.b16 %v300
        %v404 = vunpack.c.l.b16 %v301
        %v405 = vunpack.c.l.b16 %v302
        %v406 = vunpack.c.l.b16 %v303
        %v407 = vpack.c.b16 %v400, %v399
        %v408 = vpack.c.b16 %v402, %v401
        %v409 = vpack.c.b16 %v404, %v403
        %v410 = vpack.c.b16 %v406, %v405
        %vm415 = vcmask 523264
        %v417 = vsel %vm415, %v375, 0
        %v420 = vsel %vm415, %v376, 0
        %v423 = vsel %vm415, %v377, 0
        %v426 = vsel %vm415, %v378, 0
        %v429 = vsel %vm415, %v379, 0
        %v432 = vsel %vm415, %v380, 0
        %v435 = vsel %vm415, %v381, 0
        %v438 = vsel %vm415, %v382, 0
        %v441 = vsel %vm415, %v383, 0
        %v444 = vsel %vm415, %v384, 0
        %v447 = vsel %vm415, %v385, 0
        %v450 = vsel %vm415, %v386, 0
        %v453 = vsel %vm415, %v387, 0
        %v456 = vsel %vm415, %v388, 0
        %v459 = vsel %vm415, %v389, 0
        %v462 = vsel %vm415, %v390, 0
        %464 = vmatprep.subr.bf16.mxu0 0
        %465 = vmatpush1.bf16.msra.mxu0 %v407
        %466 = vmatprep.subr.bf16.mxu0 0
        %467 = vmatpush1.bf16.msra.mxu0 %v408
        %468 = vmatprep.subr.bf16.mxu0 0
        %469 = vmatpush1.bf16.msra.mxu0 %v409
        %470 = vmatprep.subr.bf16.mxu0 0
        %471 = vmatpush1.bf16.msra.mxu0 %v410
        %472 = vmatprep.subr.bf16.mxu0 0
        %473 = vmatpush1.bf16.msra.mxu0 0
        %474 = vmatprep.subr.bf16.mxu0 0
        %475 = vmatpush1.bf16.msra.mxu0 0
        %476 = vmatprep.subr.bf16.mxu0 0
        %477 = vmatpush1.bf16.msra.mxu0 0
        %478 = vmatprep.subr.bf16.mxu0 0
        %479 = vmatpush1.bf16.msra.mxu0 0
        %480 = vmatprep.subr.bf16.mxu0 0
        %481 = vmatpush1.bf16.msra.mxu0 0
        %482 = vmatprep.subr.bf16.mxu0 0
        %483 = vmatpush1.bf16.msra.mxu0 0
        %484 = vmatprep.subr.bf16.mxu0 0
        %485 = vmatpush1.bf16.msra.mxu0 0
        %486 = vmatprep.subr.bf16.mxu0 0
        %487 = vmatpush1.bf16.msra.mxu0 0
        %488 = vmatprep.subr.bf16.mxu0 0
        %489 = vmatpush1.bf16.msra.mxu0 0
        %490 = vmatprep.subr.bf16.mxu0 0
        %491 = vmatpush1.bf16.msra.mxu0 0
        %492 = vmatprep.subr.bf16.mxu0 0
        %493 = vmatpush1.bf16.msra.mxu0 0
        %494 = vmatprep.subr.bf16.mxu0 0
        %495 = vmatpush1.bf16.msra.mxu0 0
        %496 = vmatprep.mubr.bf16.mxu0 0
        %497 = vmatmul.mubr.bf16.gmra.mrb[0].mxu0 %v417
        %v498 = vpop.f32.mrb[0].mxu0
        %v499 = vadd.f32 %v309, %v498
        %v500 = vpop.f32.mrb[0].mxu0
        %v501 = vpop.f32.mrb[0].mxu0
        %v502 = vadd.f32 %v309, %v501
        %v503 = vpop.f32.mrb[0].mxu0
        %504 = vmatprep.mubr.bf16.mxu0 0
        %505 = vmatmul.mubr.bf16.gmra.mrb[0].mxu0 %v420
        %v506 = vpop.f32.mrb[0].mxu0
        %v507 = vadd.f32 %v309, %v506
        %v508 = vpop.f32.mrb[0].mxu0
        %v509 = vpop.f32.mrb[0].mxu0
        %v510 = vadd.f32 %v309, %v509
        %v511 = vpop.f32.mrb[0].mxu0
        %512 = vmatprep.mubr.bf16.mxu0 0
        %513 = vmatmul.mubr.bf16.gmra.mrb[0].mxu0 %v423
        %v514 = vpop.f32.mrb[0].mxu0
        %v515 = vadd.f32 %v309, %v514
        %v516 = vpop.f32.mrb[0].mxu0
        %v517 = vpop.f32.mrb[0].mxu0
        %v518 = vadd.f32 %v309, %v517
        %v519 = vpop.f32.mrb[0].mxu0
        %520 = vmatprep.mubr.bf16.mxu0 0
        %521 = vmatmul.mubr.bf16.gmra.mrb[0].mxu0 %v426
        %v522 = vpop.f32.mrb[0].mxu0
        %v523 = vadd.f32 %v309, %v522
        %v524 = vpop.f32.mrb[0].mxu0
        %v525 = vpop.f32.mrb[0].mxu0
        %v526 = vadd.f32 %v309, %v525
        %v527 = vpop.f32.mrb[0].mxu0
        %528 = vmatprep.mubr.bf16.mxu0 0
        %529 = vmatmul.mubr.bf16.gmra.mrb[0].mxu0 %v429
        %v530 = vpop.f32.mrb[0].mxu0
        %v531 = vadd.f32 %v309, %v530
        %v532 = vpop.f32.mrb[0].mxu0
        %v533 = vpop.f32.mrb[0].mxu0
        %v534 = vadd.f32 %v309, %v533
        %v535 = vpop.f32.mrb[0].mxu0
        %536 = vmatprep.mubr.bf16.mxu0 0
        %537 = vmatmul.mubr.bf16.gmra.mrb[0].mxu0 %v432
        %v538 = vpop.f32.mrb[0].mxu0
        %v539 = vadd.f32 %v309, %v538
        %v540 = vpop.f32.mrb[0].mxu0
        %v541 = vpop.f32.mrb[0].mxu0
        %v542 = vadd.f32 %v309, %v541
        %v543 = vpop.f32.mrb[0].mxu0
        %544 = vmatprep.mubr.bf16.mxu0 0
        %545 = vmatmul.mubr.bf16.gmra.mrb[0].mxu0 %v435
        %v546 = vpop.f32.mrb[0].mxu0
        %v547 = vadd.f32 %v309, %v546
        %v548 = vpop.f32.mrb[0].mxu0
        %v549 = vpop.f32.mrb[0].mxu0
        %v550 = vadd.f32 %v309, %v549
        %v551 = vpop.f32.mrb[0].mxu0
        %552 = vmatprep.mubr.bf16.mxu0 0
        %553 = vmatmul.mubr.bf16.gmra.mrb[0].mxu0 %v438
        %v554 = vpop.f32.mrb[0].mxu0
        %v555 = vadd.f32 %v309, %v554
        %v556 = vpop.f32.mrb[0].mxu0
        %v557 = vpop.f32.mrb[0].mxu0
        %v558 = vadd.f32 %v309, %v557
        %v559 = vpop.f32.mrb[0].mxu0
        %560 = vmatprep.mubr.bf16.mxu0 0
        %561 = vmatmul.mubr.bf16.gmra.mrb[0].mxu0 %v441
        %v562 = vpop.f32.mrb[0].mxu0
        %v563 = vadd.f32 %v309, %v562
        %v564 = vpop.f32.mrb[0].mxu0
        %v565 = vpop.f32.mrb[0].mxu0
        %v566 = vadd.f32 %v309, %v565
        %v567 = vpop.f32.mrb[0].mxu0
        %568 = vmatprep.mubr.bf16.mxu0 0
        %569 = vmatmul.mubr.bf16.gmra.mrb[0].mxu0 %v444
        %v570 = vpop.f32.mrb[0].mxu0
        %v571 = vadd.f32 %v309, %v570
        %v572 = vpop.f32.mrb[0].mxu0
        %v573 = vpop.f32.mrb[0].mxu0
        %v574 = vadd.f32 %v309, %v573
        %v575 = vpop.f32.mrb[0].mxu0
        %576 = vmatprep.mubr.bf16.mxu0 0
        %577 = vmatmul.mubr.bf16.gmra.mrb[0].mxu0 %v447
        %v578 = vpop.f32.mrb[0].mxu0
        %v579 = vadd.f32 %v309, %v578
        %v580 = vpop.f32.mrb[0].mxu0
        %v581 = vpop.f32.mrb[0].mxu0
        %v582 = vadd.f32 %v309, %v581
        %v583 = vpop.f32.mrb[0].mxu0
        %584 = vmatprep.mubr.bf16.mxu0 0
        %585 = vmatmul.mubr.bf16.gmra.mrb[0].mxu0 %v450
        %v586 = vpop.f32.mrb[0].mxu0
        %v587 = vadd.f32 %v309, %v586
        %v588 = vpop.f32.mrb[0].mxu0
        %v589 = vpop.f32.mrb[0].mxu0
        %v590 = vadd.f32 %v309, %v589
        %v591 = vpop.f32.mrb[0].mxu0
        %592 = vmatprep.mubr.bf16.mxu0 0
        %593 = vmatmul.mubr.bf16.gmra.mrb[0].mxu0 %v453
        %v594 = vpop.f32.mrb[0].mxu0
        %v595 = vadd.f32 %v309, %v594
        %v596 = vpop.f32.mrb[0].mxu0
        %v597 = vpop.f32.mrb[0].mxu0
        %v598 = vadd.f32 %v309, %v597
        %v599 = vpop.f32.mrb[0].mxu0
        %600 = vmatprep.mubr.bf16.mxu0 0
        %601 = vmatmul.mubr.bf16.gmra.mrb[0].mxu0 %v456
        %v602 = vpop.f32.mrb[0].mxu0
        %v603 = vadd.f32 %v309, %v602
        %v604 = vpop.f32.mrb[0].mxu0
        %v605 = vpop.f32.mrb[0].mxu0
        %v606 = vadd.f32 %v309, %v605
        %v607 = vpop.f32.mrb[0].mxu0
        %608 = vmatprep.mubr.bf16.mxu0 0
        %609 = vmatmul.mubr.bf16.gmra.mrb[0].mxu0 %v459
        %v610 = vpop.f32.mrb[0].mxu0
        %v611 = vadd.f32 %v309, %v610
        %v612 = vpop.f32.mrb[0].mxu0
        %v613 = vpop.f32.mrb[0].mxu0
        %v614 = vadd.f32 %v309, %v613
        %v615 = vpop.f32.mrb[0].mxu0
        %616 = vmatprep.mubr.bf16.mxu0 0
        %617 = vmatmul.mubr.bf16.gmra.mrb[0].mxu0 %v462
        %v618 = vpop.f32.mrb[0].mxu0
        %v619 = vadd.f32 %v309, %v618
        %v620 = vpop.f32.mrb[0].mxu0
        %v621 = vpop.f32.mrb[0].mxu0
        %v622 = vadd.f32 %v309, %v621
        %v623 = vpop.f32.mrb[0].mxu0
        %624 = vdwg.mxu0
        %v625 = vld [vmem:[%s260] sm:$0xff]
        %v626 = vld [vmem:[%s260 + $0x8] sm:$0xff]
        %v627 = vld [vmem:[%s260 + $0x10] sm:$0xff]
        %v628 = vld [vmem:[%s260 + $0x18] sm:$0xff]
        %v629 = vld [vmem:[%s260 + $0x20] sm:$0xff]
        %v630 = vld [vmem:[%s260 + $0x28] sm:$0xff]
        %v631 = vld [vmem:[%s260 + $0x30] sm:$0xff]
        %v632 = vld [vmem:[%s260 + $0x38] sm:$0xff]
        %v633 = vld [vmem:[%s260 + $0x40] sm:$0xff]
        %v634 = vld [vmem:[%s260 + $0x48] sm:$0xff]
        %v635 = vld [vmem:[%s260 + $0x50] sm:$0xff]
        %v636 = vld [vmem:[%s260 + $0x58] sm:$0xff]
        %v637 = vld [vmem:[%s260 + $0x60] sm:$0xff]
        %v638 = vld [vmem:[%s260 + $0x68] sm:$0xff]
        %v639 = vld [vmem:[%s260 + $0x70] sm:$0xff]
        %v640 = vld [vmem:[%s260 + $0x78] sm:$0xff]
        %v641 = vld [vmem:[%s260 + $0x80] sm:$0xff]
        %v642 = vld [vmem:[%s260 + $0x88] sm:$0xff]
        %v643 = vld [vmem:[%s260 + $0x90] sm:$0xff]
        %v644 = vld [vmem:[%s260 + $0x98] sm:$0xff]
        %v645 = vld [vmem:[%s260 + $0xa0] sm:$0xff]
        %v646 = vld [vmem:[%s260 + $0xa8] sm:$0xff]
        %v647 = vld [vmem:[%s260 + $0xb0] sm:$0xff]
        %v648 = vld [vmem:[%s260 + $0xb8] sm:$0xff]
        %v649 = vld [vmem:[%s260 + $0xc0] sm:$0xff]
        %v650 = vld [vmem:[%s260 + $0xc8] sm:$0xff]
        %v651 = vld [vmem:[%s260 + $0xd0] sm:$0xff]
        %v652 = vld [vmem:[%s260 + $0xd8] sm:$0xff]
        %v653 = vld [vmem:[%s260 + $0xe0] sm:$0xff]
        %v654 = vld [vmem:[%s260 + $0xe8] sm:$0xff]
        %v655 = vld [vmem:[%s260 + $0xf0] sm:$0xff]
        %v656 = vld [vmem:[%s260 + $0xf8] sm:$0xff]
        %658 = vset.pattern.permute.xlu0 0
        %659 = vperm.xlu0 %658, %v625
        %v660 = vpop.permute.xlu0 %659
        %663 = vset.pattern.permute.xlu0 0
        %664 = vperm.xlu0 %663, %v626
        %v665 = vpop.permute.xlu0 %664
        %668 = vset.pattern.permute.xlu0 0
        %669 = vperm.xlu0 %668, %v627
        %v670 = vpop.permute.xlu0 %669
        %673 = vset.pattern.permute.xlu0 0
        %674 = vperm.xlu0 %673, %v628
        %v675 = vpop.permute.xlu0 %674
        %678 = vset.pattern.permute.xlu0 0
        %679 = vperm.xlu0 %678, %v629
        %v680 = vpop.permute.xlu0 %679
        %683 = vset.pattern.permute.xlu0 0
        %684 = vperm.xlu0 %683, %v630
        %v685 = vpop.permute.xlu0 %684
        %688 = vset.pattern.permute.xlu0 0
        %689 = vperm.xlu0 %688, %v631
        %v690 = vpop.permute.xlu0 %689
        %693 = vset.pattern.permute.xlu0 0
        %694 = vperm.xlu0 %693, %v632
        %v695 = vpop.permute.xlu0 %694
        %698 = vset.pattern.permute.xlu0 0
        %699 = vperm.xlu0 %698, %v633
        %v700 = vpop.permute.xlu0 %699
        %703 = vset.pattern.permute.xlu0 0
        %704 = vperm.xlu0 %703, %v634
        %v705 = vpop.permute.xlu0 %704
        %708 = vset.pattern.permute.xlu0 0
        %709 = vperm.xlu0 %708, %v635
        %v710 = vpop.permute.xlu0 %709
        %713 = vset.pattern.permute.xlu0 0
        %714 = vperm.xlu0 %713, %v636
        %v715 = vpop.permute.xlu0 %714
        %718 = vset.pattern.permute.xlu0 0
        %719 = vperm.xlu0 %718, %v637
        %v720 = vpop.permute.xlu0 %719
        %723 = vset.pattern.permute.xlu0 0
        %724 = vperm.xlu0 %723, %v638
        %v725 = vpop.permute.xlu0 %724
        %728 = vset.pattern.permute.xlu0 0
        %729 = vperm.xlu0 %728, %v639
        %v730 = vpop.permute.xlu0 %729
        %733 = vset.pattern.permute.xlu0 0
        %734 = vperm.xlu0 %733, %v640
        %v735 = vpop.permute.xlu0 %734
        %738 = vset.pattern.permute.xlu0 0
        %739 = vperm.xlu0 %738, %v641
        %v740 = vpop.permute.xlu0 %739
        %743 = vset.pattern.permute.xlu0 0
        %744 = vperm.xlu0 %743, %v642
        %v745 = vpop.permute.xlu0 %744
        %748 = vset.pattern.permute.xlu0 0
        %749 = vperm.xlu0 %748, %v643
        %v750 = vpop.permute.xlu0 %749
        %753 = vset.pattern.permute.xlu0 0
        %754 = vperm.xlu0 %753, %v644
        %v755 = vpop.permute.xlu0 %754
        %758 = vset.pattern.permute.xlu0 0
        %759 = vperm.xlu0 %758, %v645
        %v760 = vpop.permute.xlu0 %759
        %763 = vset.pattern.permute.xlu0 0
        %764 = vperm.xlu0 %763, %v646
        %v765 = vpop.permute.xlu0 %764
        %768 = vset.pattern.permute.xlu0 0
        %769 = vperm.xlu0 %768, %v647
        %v770 = vpop.permute.xlu0 %769
        %773 = vset.pattern.permute.xlu0 0
        %774 = vperm.xlu0 %773, %v648
        %v775 = vpop.permute.xlu0 %774
        %778 = vset.pattern.permute.xlu0 0
        %779 = vperm.xlu0 %778, %v649
        %v780 = vpop.permute.xlu0 %779
        %783 = vset.pattern.permute.xlu0 0
        %784 = vperm.xlu0 %783, %v650
        %v785 = vpop.permute.xlu0 %784
        %788 = vset.pattern.permute.xlu0 0
        %789 = vperm.xlu0 %788, %v651
        %v790 = vpop.permute.xlu0 %789
        %793 = vset.pattern.permute.xlu0 0
        %794 = vperm.xlu0 %793, %v652
        %v795 = vpop.permute.xlu0 %794
        %798 = vset.pattern.permute.xlu0 0
        %799 = vperm.xlu0 %798, %v653
        %v800 = vpop.permute.xlu0 %799
        %803 = vset.pattern.permute.xlu0 0
        %804 = vperm.xlu0 %803, %v654
        %v805 = vpop.permute.xlu0 %804
        %808 = vset.pattern.permute.xlu0 0
        %809 = vperm.xlu0 %808, %v655
        %v810 = vpop.permute.xlu0 %809
        %813 = vset.pattern.permute.xlu0 0
        %814 = vperm.xlu0 %813, %v656
        %v815 = vpop.permute.xlu0 %814
        %v817 = vmul.f32 %v499, %v660
        %v818 = vmul.f32 %v502, %v665
        %v819 = vmul.f32 %v507, %v670
        %v820 = vmul.f32 %v510, %v675
        %v821 = vmul.f32 %v515, %v680
        %v822 = vmul.f32 %v518, %v685
        %v823 = vmul.f32 %v523, %v690
        %v824 = vmul.f32 %v526, %v695
        %v825 = vmul.f32 %v531, %v700
        %v826 = vmul.f32 %v534, %v705
        %v827 = vmul.f32 %v539, %v710
        %v828 = vmul.f32 %v542, %v715
        %v829 = vmul.f32 %v547, %v720
        %v830 = vmul.f32 %v550, %v725
        %v831 = vmul.f32 %v555, %v730
        %v832 = vmul.f32 %v558, %v735
        %v833 = vmul.f32 %v563, %v740
        %v834 = vmul.f32 %v566, %v745
        %v835 = vmul.f32 %v571, %v750
        %v836 = vmul.f32 %v574, %v755
        %v837 = vmul.f32 %v579, %v760
        %v838 = vmul.f32 %v582, %v765
        %v839 = vmul.f32 %v587, %v770
        %v840 = vmul.f32 %v590, %v775
        %v841 = vmul.f32 %v595, %v780
        %v842 = vmul.f32 %v598, %v785
        %v843 = vmul.f32 %v603, %v790
        %v844 = vmul.f32 %v606, %v795
        %v845 = vmul.f32 %v611, %v800
        %v846 = vmul.f32 %v614, %v805
        %v847 = vmul.f32 %v619, %v810
        %v848 = vmul.f32 %v622, %v815
        %vm849 = vcmask 130048
        %850 = vst.msk [vmem:[%s241] sm:$0xff] %vm849, %v817
        %851 = vst.msk [vmem:[%s241 + $0x8] sm:$0xff] %vm849, %v818
        %852 = vst.msk [vmem:[%s241 + $0x10] sm:$0xff] %vm849, %v819
        %853 = vst.msk [vmem:[%s241 + $0x18] sm:$0xff] %vm849, %v820
        %854 = vst.msk [vmem:[%s241 + $0x20] sm:$0xff] %vm849, %v821
        %855 = vst.msk [vmem:[%s241 + $0x28] sm:$0xff] %vm849, %v822
        %856 = vst.msk [vmem:[%s241 + $0x30] sm:$0xff] %vm849, %v823
        %857 = vst.msk [vmem:[%s241 + $0x38] sm:$0xff] %vm849, %v824
        %858 = vst.msk [vmem:[%s241 + $0x40] sm:$0xff] %vm849, %v825
        %859 = vst.msk [vmem:[%s241 + $0x48] sm:$0xff] %vm849, %v826
        %860 = vst.msk [vmem:[%s241 + $0x50] sm:$0xff] %vm849, %v827
        %861 = vst.msk [vmem:[%s241 + $0x58] sm:$0xff] %vm849, %v828
        %862 = vst.msk [vmem:[%s241 + $0x60] sm:$0xff] %vm849, %v829
        %863 = vst.msk [vmem:[%s241 + $0x68] sm:$0xff] %vm849, %v830
        %864 = vst.msk [vmem:[%s241 + $0x70] sm:$0xff] %vm849, %v831
        %865 = vst.msk [vmem:[%s241 + $0x78] sm:$0xff] %vm849, %v832
        %866 = vst.msk [vmem:[%s241 + $0x80] sm:$0xff] %vm849, %v833
        %867 = vst.msk [vmem:[%s241 + $0x88] sm:$0xff] %vm849, %v834
        %868 = vst.msk [vmem:[%s241 + $0x90] sm:$0xff] %vm849, %v835
        %869 = vst.msk [vmem:[%s241 + $0x98] sm:$0xff] %vm849, %v836
        %870 = vst.msk [vmem:[%s241 + $0xa0] sm:$0xff] %vm849, %v837
        %871 = vst.msk [vmem:[%s241 + $0xa8] sm:$0xff] %vm849, %v838
        %872 = vst.msk [vmem:[%s241 + $0xb0] sm:$0xff] %vm849, %v839
        %873 = vst.msk [vmem:[%s241 + $0xb8] sm:$0xff] %vm849, %v840
        %874 = vst.msk [vmem:[%s241 + $0xc0] sm:$0xff] %vm849, %v841
        %875 = vst.msk [vmem:[%s241 + $0xc8] sm:$0xff] %vm849, %v842
        %876 = vst.msk [vmem:[%s241 + $0xd0] sm:$0xff] %vm849, %v843
        %877 = vst.msk [vmem:[%s241 + $0xd8] sm:$0xff] %vm849, %v844
        %878 = vst.msk [vmem:[%s241 + $0xe0] sm:$0xff] %vm849, %v845
        %879 = vst.msk [vmem:[%s241 + $0xe8] sm:$0xff] %vm849, %v846
        %880 = vst.msk [vmem:[%s241 + $0xf0] sm:$0xff] %vm849, %v847
        %881 = vst.msk [vmem:[%s241 + $0xf8] sm:$0xff] %vm849, %v848
        %s882 = sand.u32 %s138, 1
        %s883 = scalar_lea.sflag [#allocation3], %s882
        %s884 = sand.u32 %s138, 1
        %s885 = smul.addr %s884, 256
        %s886 = scalar_lea.vmem [#allocation2], %s885
        // Predicated region
        $region37: #{outer_product_mean.5} parent=35 // pred_check
          %p887 = pneg %p148
        $region38: #{outer_product_mean.5} parent=35 // pred_check_branch
          %889 = sbr.rel (%p887) target = $region40
        $region39: #{outer_product_mean.5} parent=35 // pred_region
          %s890 = smul.u32 32, %s23
          %s892 = ssub.s32 4096, 4096
          %893 = vsyncadd %s883, %s892
          %s894 = smul.addr %s22, 32
          %s895 = sadd.s32 %s890, %s894
          %s896 = smul.addr %s895, 128
          %s897 = scalar_lea.hbm %s4, %s896
          %s898 = sshll.u32 %s886, 4
          %s899 = int_to_ptr.vmem [resolvable:$true] %s898
          %904 = dma.vmem_to_hbm [thread:$0]  %s899, 4096, %s897, %s883, 128, 128, 8
        $region40: #{outer_product_mean.5} parent=35 // pred_fallthru
          _
      $region36: #{outer_product_mean.5} parent=5 // pred_fallthru
        _
      %p905 = scmp.le.s32.totalorder 2, %s13
      // Predicated region
      $region41: #{outer_product_mean.5} parent=5 // pred_check
        %p906 = pneg %p905
      $region42: #{outer_product_mean.5} parent=5 // pred_check_branch
        %908 = sbr.rel (%p906) target = $region44
      $region43: #{outer_product_mean.5} parent=5 // pred_region
        %s909 = ssub.s32 %s13, 2
        // Predicated region
        $region45: #{outer_product_mean.5} parent=43 // pred_check
          %p910 = pneg %p154
        $region46: #{outer_product_mean.5} parent=43 // pred_check_branch
          %912 = sbr.rel (%p910) target = $region48
        $region47: #{outer_product_mean.5} parent=43 // pred_region
          %s913 = sand.u32 %s139, 1
          %s914 = scalar_lea.sflag [#allocation3], %s913
          %s915 = sand.u32 %s139, 1
          %s916 = smul.addr %s915, 256
          %s917 = scalar_lea.vmem [#allocation2], %s916
          %918 = dma.done %s914, 4096
        $region48: #{outer_product_mean.5} parent=43 // pred_fallthru
          _
      $region44: #{outer_product_mean.5} parent=5 // pred_fallthru
        _
    $region6: #{outer_product_mean.5} parent=1 // loop_footer
      %s17 = sadd.s32 1, %s13
    $region7: #{outer_product_mean.5} parent=1 // loop_footer_branch
      %12 = sbr.rel target = $region3
    $region8: #{outer_product_mean.5} parent=1 // loop_exit
      _
    %919 = vsyncpa [#allocation3], 1
    %s920 = scalar_lea.sflag [#allocation3], 1
    %921 = vsyncpa %s920, 1

</llo_original>
